<compile_context>
chip_gen: v5e
topology: v5e:2x2
jax: 0.10.0
libtpu: 0.0.40
codegen_flags: <defaults>
</compile_context>

<pallas_src>
import functools
import math

import jax
import jax.numpy as jnp
import numpy as np
from jax import lax
from jax.experimental import pallas as pl
from jax.experimental.pallas import tpu as pltpu


def _gelu_exact(x):
    # PyTorch nn.GELU() default (exact, erf-based) GELU, computed in f32.
    return 0.5 * x * (1.0 + lax.erf(x * (1.0 / math.sqrt(2.0))))


def _matmul_nt(a, b):
    # a @ b.T without materializing a transpose (f32 accumulation on the MXU).
    return lax.dot_general(a, b, (((1,), (1,)), ((), ())),
                           preferred_element_type=jnp.float32)


def _token_attention_kernel(
    x_ref,                                                   # (1, T, C) bf16
    wd1_ref, bd1_ref, wd2_ref, bd2_ref, gd_ref, betad_ref,   # q_downsample
    w1kv_ref, b1kv_ref,                                      # fused k/v layer-1
    wk2_ref, bk2_ref, gk_ref, betak_ref,                     # k_proj layer-2 + LN
    wv2_ref, bv2_ref, gv_ref, betav_ref,                     # v_proj layer-2 + LN
    wiq_ref, biq_ref, wik_ref, bik_ref, wiv_ref, biv_ref,    # MHA in-proj (full width)
    wo_ref, bo_ref,                                          # MHA out-proj (full width)
    o_ref,                                                   # (1, Lq, C) f32
    ctx_ref,                                                 # scratch (Lq, C) bf16
    *, num_heads,
):
    eps = 1e-6
    bf16 = jnp.bfloat16
    x = x_ref[0]                          # (T, C) bf16 — this grid step's batch
    C = x.shape[1]
    hd = C // num_heads

    # ---- q_downsample, computed directly in the transposed (Lq, C) layout:
    #      (x^T @ W^T)^T == W @ x, so no activation transposes are needed.
    z = jnp.dot(wd1_ref[...], x, preferred_element_type=jnp.float32) + bd1_ref[...]
    z = _gelu_exact(z).astype(bf16)
    z = jnp.dot(wd2_ref[...], z, preferred_element_type=jnp.float32) + bd2_ref[...]
    mu = jnp.mean(z, axis=0, keepdims=True)          # LN over the Lq axis (f32)
    var = jnp.mean(jnp.square(z - mu), axis=0, keepdims=True)
    q_s = ((z - mu) * lax.rsqrt(var + eps) * gd_ref[...] + betad_ref[...]).astype(bf16)

    # ---- fused k_proj / v_proj layer 1: one (T, C) x (C, 2C) matmul ----
    h1 = _matmul_nt(x, w1kv_ref[...]) + b1kv_ref[...]         # (T, 2C) f32
    h1 = _gelu_exact(h1).astype(bf16)                         # single eager cast
    hk1 = h1[:, :C]
    hv1 = h1[:, C:]

    def layernorm(h, g, beta):                                # LN over channels, f32
        m = jnp.mean(h, axis=-1, keepdims=True)
        v = jnp.mean(jnp.square(h - m), axis=-1, keepdims=True)
        return (h - m) * lax.rsqrt(v + eps) * g + beta

    k_s = layernorm(_matmul_nt(hk1, wk2_ref[...]) + bk2_ref[...],
                    gk_ref[...], betak_ref[...]).astype(bf16)  # (T, C) bf16
    v_s = layernorm(_matmul_nt(hv1, wv2_ref[...]) + bv2_ref[...],
                    gv_ref[...], betav_ref[...]).astype(bf16)  # (T, C) bf16

    # ---- MHA in-projections (q scale already folded into wiq/biq in prep) ----
    q_b = (_matmul_nt(q_s, wiq_ref[...]) + biq_ref[...]).astype(bf16)   # (Lq, C)
    k_b = (_matmul_nt(k_s, wik_ref[...]) + bik_ref[...]).astype(bf16)   # (T, C)
    v_b = (_matmul_nt(v_s, wiv_ref[...]) + biv_ref[...]).astype(bf16)   # (T, C)

    # ---- per-head attention core (tiny FLOP fraction).  Head contexts are
    #      written to static column slices of a VMEM scratch so the
    #      out-projection below stays a single full-width matmul (no concat).
    for h in range(num_heads):
        sl = slice(h * hd, (h + 1) * hd)
        s = _matmul_nt(q_b[:, sl], k_b[:, sl])                # (Lq, T) f32
        s = s - jnp.max(s, axis=-1, keepdims=True)
        e = jnp.exp(s)
        p = e * pl.reciprocal(jnp.sum(e, axis=-1, keepdims=True), approx=True)
        ctx_ref[:, sl] = jnp.dot(p.astype(bf16), v_b[:, sl],
                                 preferred_element_type=jnp.float32).astype(bf16)

    # ---- single full-width out-projection + one store ----
    out = _matmul_nt(ctx_ref[...], wo_ref[...]) + bo_ref[...]             # (Lq, C) f32
    o_ref[0] = out.astype(o_ref.dtype)


def prepare_params(params, num_heads):
    """One-time parameter preprocessing (do NOT run per forward call):
    concat of k/v first-layer weights, folding of the 1/sqrt(head_dim) scale
    into the q in-projection, bf16 casts of matmul operands, bias reshapes."""
    C = params["wk1"].shape[0]
    hd = C // num_heads
    scale = 1.0 / math.sqrt(hd)
    f32, bf16 = jnp.float32, jnp.bfloat16

    col = lambda a: a.reshape(-1, 1).astype(f32)   # (Lq,) -> (Lq, 1) transposed layout
    row = lambda a: a.reshape(1, -1).astype(f32)   # (C,)  -> (1, C)
    w = lambda a: a.astype(bf16)                   # matmul operands in bf16

    return (
        # q_downsample
        w(params["wd1"]), col(params["bd1"]), w(params["wd2"]), col(params["bd2"]),
        col(params["gd"]), col(params["betad"]),
        # fused k/v layer-1 (concat along output features)
        w(jnp.concatenate([params["wk1"], params["wv1"]], axis=0)),
        row(jnp.concatenate([params["bk1"], params["bv1"]], axis=0)),
        # k_proj layer-2 + LN
        w(params["wk2"]), row(params["bk2"]), row(params["gk"]), row(params["betak"]),
        # v_proj layer-2 + LN
        w(params["wv2"]), row(params["bv2"]), row(params["gv"]), row(params["betav"]),
        # MHA in-proj (scale folded into q weights/bias) and out-proj
        w(params["wiq"] * scale), row(params["biq"] * scale),
        w(params["wik"]), row(params["bik"]),
        w(params["wiv"]), row(params["biv"]),
        w(params["wo"]), row(params["bo"]),
    )


def token_attention(hidden_states, prepared, num_heads):
    B, T, C = hidden_states.shape
    Lq = prepared[2].shape[0]                       # wd2 is (Lq, Lq)
    x = hidden_states.astype(jnp.bfloat16)

    kernel = functools.partial(_token_attention_kernel, num_heads=num_heads)

    # x / out are pipelined per-batch blocks; weights are whole-array VMEM
    # residents (grid-invariant index -> fetched once, not re-streamed).
    x_spec = pl.BlockSpec((1, T, C), lambda b: (b, 0, 0))
    weight_spec = pl.BlockSpec(memory_space=pltpu.MemorySpace.VMEM)
    out_spec = pl.BlockSpec((1, Lq, C), lambda b: (b, 0, 0))

    out = pl.pallas_call(
        kernel,
        out_shape=jax.ShapeDtypeStruct((B, Lq, C), jnp.float32),
        grid=(B,),
        in_specs=[x_spec] + [weight_spec] * len(prepared),
        out_specs=out_spec,
        scratch_shapes=[pltpu.VMEM((Lq, C), jnp.bfloat16)],
        compiler_params=pltpu.CompilerParams(
            # Batch steps are independent -> shard across v7x's 2 TensorCores.
            dimension_semantics=("parallel",),
            # Re-derive per generation; 64 MiB is the v7x physical ceiling and
            # leaves ample headroom on v5e/v6e (128 MiB physical).
            vmem_limit_bytes=64 * 1024 * 1024,
        ),
    )(x, *prepared)
    return out


def init_params(key, T, C, Lq):
    ks = iter(jax.random.split(key, 32))
    n = lambda shape, s=0.08: s * jax.random.normal(next(ks), shape, dtype=jnp.float32)
    p = {}
    # q_downsample: Linear(T->Lq), GELU, Linear(Lq->Lq), LayerNorm(Lq)
    p["wd1"], p["bd1"] = n((Lq, T)), n((Lq,))
    p["wd2"], p["bd2"] = n((Lq, Lq)), n((Lq,))
    p["gd"], p["betad"] = 1.0 + n((Lq,)), n((Lq,))
    # k_proj: Linear(C->C), GELU, Linear(C->C), LayerNorm(C)
    p["wk1"], p["bk1"] = n((C, C)), n((C,))
    p["wk2"], p["bk2"] = n((C, C)), n((C,))
    p["gk"], p["betak"] = 1.0 + n((C,)), n((C,))
    # v_proj: same structure
    p["wv1"], p["bv1"] = n((C, C)), n((C,))
    p["wv2"], p["bv2"] = n((C, C)), n((C,))
    p["gv"], p["betav"] = 1.0 + n((C,)), n((C,))
    # clip_attn (nn.MultiheadAttention): in_proj split into q/k/v + out_proj
    p["wiq"], p["biq"] = n((C, C)), n((C,))
    p["wik"], p["bik"] = n((C, C)), n((C,))
    p["wiv"], p["biv"] = n((C, C)), n((C,))
    p["wo"], p["bo"] = n((C, C)), n((C,))
    return p


def token_attention_ref(x, p, num_heads):
    # Pure-JAX f32 reference mirroring the PyTorch module exactly.
    eps = 1e-6
    gelu = lambda h: 0.5 * h * (1.0 + lax.erf(h / math.sqrt(2.0)))

    def mlp_ln(h, w1, b1, w2, b2, g, beta):
        h = h @ w1.T + b1
        h = gelu(h)
        h = h @ w2.T + b2
        m = h.mean(-1, keepdims=True)
        v = ((h - m) ** 2).mean(-1, keepdims=True)
        return (h - m) / jnp.sqrt(v + eps) * g + beta

    B, T, C = x.shape
    H = num_heads
    hd = C // H
    Lq = p["wd2"].shape[0]
    q_s = jnp.swapaxes(mlp_ln(jnp.swapaxes(x, 1, 2), p["wd1"], p["bd1"],
                              p["wd2"], p["bd2"], p["gd"], p["betad"]), 1, 2)
    k_s = mlp_ln(x, p["wk1"], p["bk1"], p["wk2"], p["bk2"], p["gk"], p["betak"])
    v_s = mlp_ln(x, p["wv1"], p["bv1"], p["wv2"], p["bv2"], p["gv"], p["betav"])
    q = q_s @ p["wiq"].T + p["biq"]
    k = k_s @ p["wik"].T + p["bik"]
    v = v_s @ p["wiv"].T + p["biv"]
    qh = q.reshape(B, Lq, H, hd).transpose(0, 2, 1, 3)
    kh = k.reshape(B, T, H, hd).transpose(0, 2, 1, 3)
    vh = v.reshape(B, T, H, hd).transpose(0, 2, 1, 3)
    s = jnp.einsum("bhqd,bhkd->bhqk", qh * (hd ** -0.5), kh)
    w = jax.nn.softmax(s, axis=-1)
    ctx = jnp.einsum("bhqk,bhkd->bhqd", w, vh).transpose(0, 2, 1, 3).reshape(B, Lq, C)
    return ctx @ p["wo"].T + p["bo"]


if __name__ == "__main__":
    # Small config consistent with the module:
    #   visual_token_count T=16, embed_dim C=32, num_attention_heads H=4,
    #   combined_token_count Lq=2, batch B=2.
    B, T, C = 2, 16, 32
    H, Lq = 4, 2

    key = jax.random.PRNGKey(0)
    kx, kp = jax.random.split(key)
    hidden_states = jax.random.normal(kx, (B, T, C), dtype=jnp.float32)
    params = init_params(kp, T, C, Lq)

    # One-time parameter preprocessing (outside the per-call path).
    prepared = prepare_params(params, H)

    out = token_attention(hidden_states, prepared, num_heads=H)
    out = jax.block_until_ready(out)

    ref = token_attention_ref(hidden_states, params, H)
    # Tolerance relaxed vs. pure f32: matmul operands are bf16 (f32 accumulate)
    # and the softmax reciprocal is the EUP approximation.
    np.testing.assert_allclose(np.asarray(out), np.asarray(ref), rtol=3e-2, atol=3e-2)
    print("KERNEL_OK")
</pallas_src>

<mosaic_0001>
module attributes {stable_mosaic.version = 11 : i64} {
  func.func @_token_attention_kernel(%arg0: i32, %arg1: memref<1x16x32xbf16, #tpu.memory_space<vmem>>, %arg2: memref<2x16xbf16, #tpu.memory_space<vmem>>, %arg3: memref<2x1xf32, #tpu.memory_space<vmem>>, %arg4: memref<2x2xbf16, #tpu.memory_space<vmem>>, %arg5: memref<2x1xf32, #tpu.memory_space<vmem>>, %arg6: memref<2x1xf32, #tpu.memory_space<vmem>>, %arg7: memref<2x1xf32, #tpu.memory_space<vmem>>, %arg8: memref<64x32xbf16, #tpu.memory_space<vmem>>, %arg9: memref<1x64xf32, #tpu.memory_space<vmem>>, %arg10: memref<32x32xbf16, #tpu.memory_space<vmem>>, %arg11: memref<1x32xf32, #tpu.memory_space<vmem>>, %arg12: memref<1x32xf32, #tpu.memory_space<vmem>>, %arg13: memref<1x32xf32, #tpu.memory_space<vmem>>, %arg14: memref<32x32xbf16, #tpu.memory_space<vmem>>, %arg15: memref<1x32xf32, #tpu.memory_space<vmem>>, %arg16: memref<1x32xf32, #tpu.memory_space<vmem>>, %arg17: memref<1x32xf32, #tpu.memory_space<vmem>>, %arg18: memref<32x32xbf16, #tpu.memory_space<vmem>>, %arg19: memref<1x32xf32, #tpu.memory_space<vmem>>, %arg20: memref<32x32xbf16, #tpu.memory_space<vmem>>, %arg21: memref<1x32xf32, #tpu.memory_space<vmem>>, %arg22: memref<32x32xbf16, #tpu.memory_space<vmem>>, %arg23: memref<1x32xf32, #tpu.memory_space<vmem>>, %arg24: memref<32x32xbf16, #tpu.memory_space<vmem>>, %arg25: memref<1x32xf32, #tpu.memory_space<vmem>>, %arg26: memref<1x2x32xf32, #tpu.memory_space<vmem>>, %arg27: memref<2x32xbf16, #tpu.memory_space<vmem>>) attributes {dimension_semantics = [#tpu.dimension_semantics<parallel>], iteration_bounds = array<i64: 2>, scalar_prefetch = 0 : i64, scratch_operands = 1 : i64, tpu.core_type = #tpu.core_type<tc>, window_params = [{transform_indices = @transform_0, window_bounds = array<i64: 1, 16, 32>}, {pipeline_mode = #tpu.pipeline_mode<synchronous>, transform_indices = @transform_1, window_bounds = array<i64: 2, 16>}, {pipeline_mode = #tpu.pipeline_mode<synchronous>, transform_indices = @transform_2, window_bounds = array<i64: 2, 1>}, {pipeline_mode = #tpu.pipeline_mode<synchronous>, transform_indices = @transform_3, window_bounds = array<i64: 2, 2>}, {pipeline_mode = #tpu.pipeline_mode<synchronous>, transform_indices = @transform_4, window_bounds = array<i64: 2, 1>}, {pipeline_mode = #tpu.pipeline_mode<synchronous>, transform_indices = @transform_5, window_bounds = array<i64: 2, 1>}, {pipeline_mode = #tpu.pipeline_mode<synchronous>, transform_indices = @transform_6, window_bounds = array<i64: 2, 1>}, {pipeline_mode = #tpu.pipeline_mode<synchronous>, transform_indices = @transform_7, window_bounds = array<i64: 64, 32>}, {pipeline_mode = #tpu.pipeline_mode<synchronous>, transform_indices = @transform_8, window_bounds = array<i64: 1, 64>}, {pipeline_mode = #tpu.pipeline_mode<synchronous>, transform_indices = @transform_9, window_bounds = array<i64: 32, 32>}, {pipeline_mode = #tpu.pipeline_mode<synchronous>, transform_indices = @transform_10, window_bounds = array<i64: 1, 32>}, {pipeline_mode = #tpu.pipeline_mode<synchronous>, transform_indices = @transform_11, window_bounds = array<i64: 1, 32>}, {pipeline_mode = #tpu.pipeline_mode<synchronous>, transform_indices = @transform_12, window_bounds = array<i64: 1, 32>}, {pipeline_mode = #tpu.pipeline_mode<synchronous>, transform_indices = @transform_13, window_bounds = array<i64: 32, 32>}, {pipeline_mode = #tpu.pipeline_mode<synchronous>, transform_indices = @transform_14, window_bounds = array<i64: 1, 32>}, {pipeline_mode = #tpu.pipeline_mode<synchronous>, transform_indices = @transform_15, window_bounds = array<i64: 1, 32>}, {pipeline_mode = #tpu.pipeline_mode<synchronous>, transform_indices = @transform_16, window_bounds = array<i64: 1, 32>}, {pipeline_mode = #tpu.pipeline_mode<synchronous>, transform_indices = @transform_17, window_bounds = array<i64: 32, 32>}, {pipeline_mode = #tpu.pipeline_mode<synchronous>, transform_indices = @transform_18, window_bounds = array<i64: 1, 32>}, {pipeline_mode = #tpu.pipeline_mode<synchronous>, transform_indices = @transform_19, window_bounds = array<i64: 32, 32>}, {pipeline_mode = #tpu.pipeline_mode<synchronous>, transform_indices = @transform_20, window_bounds = array<i64: 1, 32>}, {pipeline_mode = #tpu.pipeline_mode<synchronous>, transform_indices = @transform_21, window_bounds = array<i64: 32, 32>}, {pipeline_mode = #tpu.pipeline_mode<synchronous>, transform_indices = @transform_22, window_bounds = array<i64: 1, 32>}, {pipeline_mode = #tpu.pipeline_mode<synchronous>, transform_indices = @transform_23, window_bounds = array<i64: 32, 32>}, {pipeline_mode = #tpu.pipeline_mode<synchronous>, transform_indices = @transform_24, window_bounds = array<i64: 1, 32>}, {transform_indices = @transform_25, window_bounds = array<i64: 1, 2, 32>}]} {
    %c0 = arith.constant 0 : index
    %c0_0 = arith.constant 0 : index
    %c0_1 = arith.constant 0 : index
    %0 = vector.load %arg1[%c0, %c0_0, %c0_1] : memref<1x16x32xbf16, #tpu.memory_space<vmem>>, vector<1x16x32xbf16>
    %1 = vector.shape_cast %0 : vector<1x16x32xbf16> to vector<16x32xbf16>
    %c0_2 = arith.constant 0 : index
    %c0_3 = arith.constant 0 : index
    %2 = vector.load %arg2[%c0_2, %c0_3] : memref<2x16xbf16, #tpu.memory_space<vmem>>, vector<2x16xbf16>
    %cst = arith.constant dense<0.000000e+00> : vector<2x32xf32>
    %3 = tpu.matmul %2, %1, %cst {dimension_numbers = #tpu.dot_dimension_numbers<[1], [0], [0], [1], [0, 0, 1, 1], [], []>} : vector<2x16xbf16>, vector<16x32xbf16>, vector<2x32xf32> -> vector<2x32xf32>
    %c0_4 = arith.constant 0 : index
    %c0_5 = arith.constant 0 : index
    %4 = vector.load %arg3[%c0_4, %c0_5] : memref<2x1xf32, #tpu.memory_space<vmem>>, vector<2x1xf32>
    %5 = vector.broadcast %4 : vector<2x1xf32> to vector<2x32xf32>
    %6 = arith.addf %3, %5 : vector<2x32xf32>
    %cst_6 = arith.constant 5.000000e-01 : f32
    %7 = vector.broadcast %cst_6 : f32 to vector<2x32xf32>
    %8 = arith.mulf %7, %6 : vector<2x32xf32>
    %cst_7 = arith.constant 0.707106769 : f32
    %9 = vector.broadcast %cst_7 : f32 to vector<2x32xf32>
    %10 = arith.mulf %6, %9 : vector<2x32xf32>
    %11 = math.erf %10 : vector<2x32xf32>
    %cst_8 = arith.constant 1.000000e+00 : f32
    %12 = vector.broadcast %cst_8 : f32 to vector<2x32xf32>
    %13 = arith.addf %12, %11 : vector<2x32xf32>
    %14 = arith.mulf %8, %13 : vector<2x32xf32>
    %15 = arith.truncf %14 : vector<2x32xf32> to vector<2x32xbf16>
    %c0_9 = arith.constant 0 : index
    %c0_10 = arith.constant 0 : index
    %16 = vector.load %arg4[%c0_9, %c0_10] : memref<2x2xbf16, #tpu.memory_space<vmem>>, vector<2x2xbf16>
    %cst_11 = arith.constant dense<0.000000e+00> : vector<2x32xf32>
    %17 = tpu.matmul %16, %15, %cst_11 {dimension_numbers = #tpu.dot_dimension_numbers<[1], [0], [0], [1], [0, 0, 1, 1], [], []>} : vector<2x2xbf16>, vector<2x32xbf16>, vector<2x32xf32> -> vector<2x32xf32>
    %c0_12 = arith.constant 0 : index
    %c0_13 = arith.constant 0 : index
    %18 = vector.load %arg5[%c0_12, %c0_13] : memref<2x1xf32, #tpu.memory_space<vmem>>, vector<2x1xf32>
    %19 = vector.broadcast %18 : vector<2x1xf32> to vector<2x32xf32>
    %20 = arith.addf %17, %19 : vector<2x32xf32>
    %cst_14 = arith.constant dense<0.000000e+00> : vector<32xf32>
    %21 = vector.multi_reduction <add>, %20, %cst_14 [0] : vector<2x32xf32> to vector<32xf32>
    %22 = vector.shape_cast %21 : vector<32xf32> to vector<1x32xf32>
    %cst_15 = arith.constant 2.000000e+00 : f32
    %23 = vector.broadcast %cst_15 : f32 to vector<1x32xf32>
    %24 = arith.divf %22, %23 : vector<1x32xf32>
    %25 = vector.broadcast %24 : vector<1x32xf32> to vector<2x32xf32>
    %26 = arith.subf %20, %25 : vector<2x32xf32>
    %27 = arith.mulf %26, %26 : vector<2x32xf32>
    %cst_16 = arith.constant dense<0.000000e+00> : vector<32xf32>
    %28 = vector.multi_reduction <add>, %27, %cst_16 [0] : vector<2x32xf32> to vector<32xf32>
    %29 = vector.shape_cast %28 : vector<32xf32> to vector<1x32xf32>
    %cst_17 = arith.constant 2.000000e+00 : f32
    %30 = vector.broadcast %cst_17 : f32 to vector<1x32xf32>
    %31 = arith.divf %29, %30 : vector<1x32xf32>
    %32 = vector.broadcast %24 : vector<1x32xf32> to vector<2x32xf32>
    %33 = arith.subf %20, %32 : vector<2x32xf32>
    %cst_18 = arith.constant 9.99999997E-7 : f32
    %34 = vector.broadcast %cst_18 : f32 to vector<1x32xf32>
    %35 = arith.addf %31, %34 : vector<1x32xf32>
    %36 = math.rsqrt %35 : vector<1x32xf32>
    %37 = vector.broadcast %36 : vector<1x32xf32> to vector<2x32xf32>
    %38 = arith.mulf %33, %37 : vector<2x32xf32>
    %c0_19 = arith.constant 0 : index
    %c0_20 = arith.constant 0 : index
    %39 = vector.load %arg6[%c0_19, %c0_20] : memref<2x1xf32, #tpu.memory_space<vmem>>, vector<2x1xf32>
    %40 = vector.broadcast %39 : vector<2x1xf32> to vector<2x32xf32>
    %41 = arith.mulf %38, %40 : vector<2x32xf32>
    %c0_21 = arith.constant 0 : index
    %c0_22 = arith.constant 0 : index
    %42 = vector.load %arg7[%c0_21, %c0_22] : memref<2x1xf32, #tpu.memory_space<vmem>>, vector<2x1xf32>
    %43 = vector.broadcast %42 : vector<2x1xf32> to vector<2x32xf32>
    %44 = arith.addf %41, %43 : vector<2x32xf32>
    %45 = arith.truncf %44 : vector<2x32xf32> to vector<2x32xbf16>
    %c0_23 = arith.constant 0 : index
    %c0_24 = arith.constant 0 : index
    %46 = vector.load %arg8[%c0_23, %c0_24] : memref<64x32xbf16, #tpu.memory_space<vmem>>, vector<64x32xbf16>
    %cst_25 = arith.constant dense<0.000000e+00> : vector<16x64xf32>
    %47 = tpu.matmul %1, %46, %cst_25 {dimension_numbers = #tpu.dot_dimension_numbers<[1], [1], [0], [0], [0, 0, 1, 0], [], []>} : vector<16x32xbf16>, vector<64x32xbf16>, vector<16x64xf32> -> vector<16x64xf32>
    %c0_26 = arith.constant 0 : index
    %c0_27 = arith.constant 0 : index
    %48 = vector.load %arg9[%c0_26, %c0_27] : memref<1x64xf32, #tpu.memory_space<vmem>>, vector<1x64xf32>
    %49 = vector.broadcast %48 : vector<1x64xf32> to vector<16x64xf32>
    %50 = arith.addf %47, %49 : vector<16x64xf32>
    %cst_28 = arith.constant 5.000000e-01 : f32
    %51 = vector.broadcast %cst_28 : f32 to vector<16x64xf32>
    %52 = arith.mulf %51, %50 : vector<16x64xf32>
    %cst_29 = arith.constant 0.707106769 : f32
    %53 = vector.broadcast %cst_29 : f32 to vector<16x64xf32>
    %54 = arith.mulf %50, %53 : vector<16x64xf32>
    %55 = math.erf %54 : vector<16x64xf32>
    %cst_30 = arith.constant 1.000000e+00 : f32
    %56 = vector.broadcast %cst_30 : f32 to vector<16x64xf32>
    %57 = arith.addf %56, %55 : vector<16x64xf32>
    %58 = arith.mulf %52, %57 : vector<16x64xf32>
    %59 = arith.truncf %58 : vector<16x64xf32> to vector<16x64xbf16>
    %60 = vector.extract_strided_slice %59 {offsets = [0, 0], sizes = [16, 32], strides = [1, 1]} : vector<16x64xbf16> to vector<16x32xbf16>
    %61 = vector.extract_strided_slice %59 {offsets = [0, 32], sizes = [16, 32], strides = [1, 1]} : vector<16x64xbf16> to vector<16x32xbf16>
    %c0_31 = arith.constant 0 : index
    %c0_32 = arith.constant 0 : index
    %62 = vector.load %arg10[%c0_31, %c0_32] : memref<32x32xbf16, #tpu.memory_space<vmem>>, vector<32x32xbf16>
    %cst_33 = arith.constant dense<0.000000e+00> : vector<16x32xf32>
    %63 = tpu.matmul %60, %62, %cst_33 {dimension_numbers = #tpu.dot_dimension_numbers<[1], [1], [0], [0], [0, 0, 1, 0], [], []>} : vector<16x32xbf16>, vector<32x32xbf16>, vector<16x32xf32> -> vector<16x32xf32>
    %c0_34 = arith.constant 0 : index
    %c0_35 = arith.constant 0 : index
    %64 = vector.load %arg11[%c0_34, %c0_35] : memref<1x32xf32, #tpu.memory_space<vmem>>, vector<1x32xf32>
    %65 = vector.broadcast %64 : vector<1x32xf32> to vector<16x32xf32>
    %66 = arith.addf %63, %65 : vector<16x32xf32>
    %c0_36 = arith.constant 0 : index
    %c0_37 = arith.constant 0 : index
    %67 = vector.load %arg12[%c0_36, %c0_37] : memref<1x32xf32, #tpu.memory_space<vmem>>, vector<1x32xf32>
    %c0_38 = arith.constant 0 : index
    %c0_39 = arith.constant 0 : index
    %68 = vector.load %arg13[%c0_38, %c0_39] : memref<1x32xf32, #tpu.memory_space<vmem>>, vector<1x32xf32>
    %cst_40 = arith.constant dense<0.000000e+00> : vector<16xf32>
    %69 = vector.multi_reduction <add>, %66, %cst_40 [1] : vector<16x32xf32> to vector<16xf32>
    %70 = vector.shape_cast %69 : vector<16xf32> to vector<16x1xf32>
    %cst_41 = arith.constant 3.200000e+01 : f32
    %71 = vector.broadcast %cst_41 : f32 to vector<16x1xf32>
    %72 = arith.divf %70, %71 : vector<16x1xf32>
    %73 = vector.broadcast %72 : vector<16x1xf32> to vector<16x32xf32>
    %74 = arith.subf %66, %73 : vector<16x32xf32>
    %75 = arith.mulf %74, %74 : vector<16x32xf32>
    %cst_42 = arith.constant dense<0.000000e+00> : vector<16xf32>
    %76 = vector.multi_reduction <add>, %75, %cst_42 [1] : vector<16x32xf32> to vector<16xf32>
    %77 = vector.shape_cast %76 : vector<16xf32> to vector<16x1xf32>
    %cst_43 = arith.constant 3.200000e+01 : f32
    %78 = vector.broadcast %cst_43 : f32 to vector<16x1xf32>
    %79 = arith.divf %77, %78 : vector<16x1xf32>
    %80 = vector.broadcast %72 : vector<16x1xf32> to vector<16x32xf32>
    %81 = arith.subf %66, %80 : vector<16x32xf32>
    %cst_44 = arith.constant 9.99999997E-7 : f32
    %82 = vector.broadcast %cst_44 : f32 to vector<16x1xf32>
    %83 = arith.addf %79, %82 : vector<16x1xf32>
    %84 = math.rsqrt %83 : vector<16x1xf32>
    %85 = vector.broadcast %84 : vector<16x1xf32> to vector<16x32xf32>
    %86 = arith.mulf %81, %85 : vector<16x32xf32>
    %87 = vector.broadcast %67 : vector<1x32xf32> to vector<16x32xf32>
    %88 = arith.mulf %86, %87 : vector<16x32xf32>
    %89 = vector.broadcast %68 : vector<1x32xf32> to vector<16x32xf32>
    %90 = arith.addf %88, %89 : vector<16x32xf32>
    %91 = arith.truncf %90 : vector<16x32xf32> to vector<16x32xbf16>
    %c0_45 = arith.constant 0 : index
    %c0_46 = arith.constant 0 : index
    %92 = vector.load %arg14[%c0_45, %c0_46] : memref<32x32xbf16, #tpu.memory_space<vmem>>, vector<32x32xbf16>
    %cst_47 = arith.constant dense<0.000000e+00> : vector<16x32xf32>
    %93 = tpu.matmul %61, %92, %cst_47 {dimension_numbers = #tpu.dot_dimension_numbers<[1], [1], [0], [0], [0, 0, 1, 0], [], []>} : vector<16x32xbf16>, vector<32x32xbf16>, vector<16x32xf32> -> vector<16x32xf32>
    %c0_48 = arith.constant 0 : index
    %c0_49 = arith.constant 0 : index
    %94 = vector.load %arg15[%c0_48, %c0_49] : memref<1x32xf32, #tpu.memory_space<vmem>>, vector<1x32xf32>
    %95 = vector.broadcast %94 : vector<1x32xf32> to vector<16x32xf32>
    %96 = arith.addf %93, %95 : vector<16x32xf32>
    %c0_50 = arith.constant 0 : index
    %c0_51 = arith.constant 0 : index
    %97 = vector.load %arg16[%c0_50, %c0_51] : memref<1x32xf32, #tpu.memory_space<vmem>>, vector<1x32xf32>
    %c0_52 = arith.constant 0 : index
    %c0_53 = arith.constant 0 : index
    %98 = vector.load %arg17[%c0_52, %c0_53] : memref<1x32xf32, #tpu.memory_space<vmem>>, vector<1x32xf32>
    %cst_54 = arith.constant dense<0.000000e+00> : vector<16xf32>
    %99 = vector.multi_reduction <add>, %96, %cst_54 [1] : vector<16x32xf32> to vector<16xf32>
    %100 = vector.shape_cast %99 : vector<16xf32> to vector<16x1xf32>
    %cst_55 = arith.constant 3.200000e+01 : f32
    %101 = vector.broadcast %cst_55 : f32 to vector<16x1xf32>
    %102 = arith.divf %100, %101 : vector<16x1xf32>
    %103 = vector.broadcast %102 : vector<16x1xf32> to vector<16x32xf32>
    %104 = arith.subf %96, %103 : vector<16x32xf32>
    %105 = arith.mulf %104, %104 : vector<16x32xf32>
    %cst_56 = arith.constant dense<0.000000e+00> : vector<16xf32>
    %106 = vector.multi_reduction <add>, %105, %cst_56 [1] : vector<16x32xf32> to vector<16xf32>
    %107 = vector.shape_cast %106 : vector<16xf32> to vector<16x1xf32>
    %cst_57 = arith.constant 3.200000e+01 : f32
    %108 = vector.broadcast %cst_57 : f32 to vector<16x1xf32>
    %109 = arith.divf %107, %108 : vector<16x1xf32>
    %110 = vector.broadcast %102 : vector<16x1xf32> to vector<16x32xf32>
    %111 = arith.subf %96, %110 : vector<16x32xf32>
    %cst_58 = arith.constant 9.99999997E-7 : f32
    %112 = vector.broadcast %cst_58 : f32 to vector<16x1xf32>
    %113 = arith.addf %109, %112 : vector<16x1xf32>
    %114 = math.rsqrt %113 : vector<16x1xf32>
    %115 = vector.broadcast %114 : vector<16x1xf32> to vector<16x32xf32>
    %116 = arith.mulf %111, %115 : vector<16x32xf32>
    %117 = vector.broadcast %97 : vector<1x32xf32> to vector<16x32xf32>
    %118 = arith.mulf %116, %117 : vector<16x32xf32>
    %119 = vector.broadcast %98 : vector<1x32xf32> to vector<16x32xf32>
    %120 = arith.addf %118, %119 : vector<16x32xf32>
    %121 = arith.truncf %120 : vector<16x32xf32> to vector<16x32xbf16>
    %c0_59 = arith.constant 0 : index
    %c0_60 = arith.constant 0 : index
    %122 = vector.load %arg18[%c0_59, %c0_60] : memref<32x32xbf16, #tpu.memory_space<vmem>>, vector<32x32xbf16>
    %cst_61 = arith.constant dense<0.000000e+00> : vector<2x32xf32>
    %123 = tpu.matmul %45, %122, %cst_61 {dimension_numbers = #tpu.dot_dimension_numbers<[1], [1], [0], [0], [0, 0, 1, 0], [], []>} : vector<2x32xbf16>, vector<32x32xbf16>, vector<2x32xf32> -> vector<2x32xf32>
    %c0_62 = arith.constant 0 : index
    %c0_63 = arith.constant 0 : index
    %124 = vector.load %arg19[%c0_62, %c0_63] : memref<1x32xf32, #tpu.memory_space<vmem>>, vector<1x32xf32>
    %125 = vector.broadcast %124 : vector<1x32xf32> to vector<2x32xf32>
    %126 = arith.addf %123, %125 : vector<2x32xf32>
    %127 = arith.truncf %126 : vector<2x32xf32> to vector<2x32xbf16>
    %c0_64 = arith.constant 0 : index
    %c0_65 = arith.constant 0 : index
    %128 = vector.load %arg20[%c0_64, %c0_65] : memref<32x32xbf16, #tpu.memory_space<vmem>>, vector<32x32xbf16>
    %cst_66 = arith.constant dense<0.000000e+00> : vector<16x32xf32>
    %129 = tpu.matmul %91, %128, %cst_66 {dimension_numbers = #tpu.dot_dimension_numbers<[1], [1], [0], [0], [0, 0, 1, 0], [], []>} : vector<16x32xbf16>, vector<32x32xbf16>, vector<16x32xf32> -> vector<16x32xf32>
    %c0_67 = arith.constant 0 : index
    %c0_68 = arith.constant 0 : index
    %130 = vector.load %arg21[%c0_67, %c0_68] : memref<1x32xf32, #tpu.memory_space<vmem>>, vector<1x32xf32>
    %131 = vector.broadcast %130 : vector<1x32xf32> to vector<16x32xf32>
    %132 = arith.addf %129, %131 : vector<16x32xf32>
    %133 = arith.truncf %132 : vector<16x32xf32> to vector<16x32xbf16>
    %c0_69 = arith.constant 0 : index
    %c0_70 = arith.constant 0 : index
    %134 = vector.load %arg22[%c0_69, %c0_70] : memref<32x32xbf16, #tpu.memory_space<vmem>>, vector<32x32xbf16>
    %cst_71 = arith.constant dense<0.000000e+00> : vector<16x32xf32>
    %135 = tpu.matmul %121, %134, %cst_71 {dimension_numbers = #tpu.dot_dimension_numbers<[1], [1], [0], [0], [0, 0, 1, 0], [], []>} : vector<16x32xbf16>, vector<32x32xbf16>, vector<16x32xf32> -> vector<16x32xf32>
    %c0_72 = arith.constant 0 : index
    %c0_73 = arith.constant 0 : index
    %136 = vector.load %arg23[%c0_72, %c0_73] : memref<1x32xf32, #tpu.memory_space<vmem>>, vector<1x32xf32>
    %137 = vector.broadcast %136 : vector<1x32xf32> to vector<16x32xf32>
    %138 = arith.addf %135, %137 : vector<16x32xf32>
    %139 = arith.truncf %138 : vector<16x32xf32> to vector<16x32xbf16>
    %140 = vector.extract_strided_slice %127 {offsets = [0, 0], sizes = [2, 8], strides = [1, 1]} : vector<2x32xbf16> to vector<2x8xbf16>
    %141 = vector.extract_strided_slice %133 {offsets = [0, 0], sizes = [16, 8], strides = [1, 1]} : vector<16x32xbf16> to vector<16x8xbf16>
    %cst_74 = arith.constant dense<0.000000e+00> : vector<2x16xf32>
    %142 = tpu.matmul %140, %141, %cst_74 {dimension_numbers = #tpu.dot_dimension_numbers<[1], [1], [0], [0], [0, 0, 1, 0], [], []>} : vector<2x8xbf16>, vector<16x8xbf16>, vector<2x16xf32> -> vector<2x16xf32>
    %cst_75 = arith.constant dense<0xFF800000> : vector<2xf32>
    %143 = vector.multi_reduction <maximumf>, %142, %cst_75 [1] : vector<2x16xf32> to vector<2xf32>
    %144 = vector.shape_cast %143 : vector<2xf32> to vector<2x1xf32>
    %145 = vector.broadcast %144 : vector<2x1xf32> to vector<2x16xf32>
    %146 = arith.subf %142, %145 : vector<2x16xf32>
    %147 = math.exp %146 : vector<2x16xf32>
    %cst_76 = arith.constant dense<0.000000e+00> : vector<2xf32>
    %148 = vector.multi_reduction <add>, %147, %cst_76 [1] : vector<2x16xf32> to vector<2xf32>
    %149 = vector.shape_cast %148 : vector<2xf32> to vector<2x1xf32>
    %150 = tpu.reciprocal %149 {approx = true} : vector<2x1xf32> -> vector<2x1xf32>
    %151 = vector.broadcast %150 : vector<2x1xf32> to vector<2x16xf32>
    %152 = arith.mulf %147, %151 : vector<2x16xf32>
    %153 = arith.truncf %152 : vector<2x16xf32> to vector<2x16xbf16>
    %154 = vector.extract_strided_slice %139 {offsets = [0, 0], sizes = [16, 8], strides = [1, 1]} : vector<16x32xbf16> to vector<16x8xbf16>
    %cst_77 = arith.constant dense<0.000000e+00> : vector<2x8xf32>
    %155 = tpu.matmul %153, %154, %cst_77 {dimension_numbers = #tpu.dot_dimension_numbers<[1], [0], [0], [1], [0, 0, 1, 1], [], []>} : vector<2x16xbf16>, vector<16x8xbf16>, vector<2x8xf32> -> vector<2x8xf32>
    %156 = arith.truncf %155 : vector<2x8xf32> to vector<2x8xbf16>
    %c0_78 = arith.constant 0 : index
    %c0_79 = arith.constant 0 : index
    %157 = vector.load %arg27[%c0_78, %c0_79] : memref<2x32xbf16, #tpu.memory_space<vmem>>, vector<2x8xbf16>
    tpu.vector_store %arg27[%c0_78, %c0_79], %156 {strides = array<i32>} : memref<2x32xbf16, #tpu.memory_space<vmem>>, vector<2x8xbf16>,
    %158 = vector.extract_strided_slice %127 {offsets = [0, 8], sizes = [2, 8], strides = [1, 1]} : vector<2x32xbf16> to vector<2x8xbf16>
    %159 = vector.extract_strided_slice %133 {offsets = [0, 8], sizes = [16, 8], strides = [1, 1]} : vector<16x32xbf16> to vector<16x8xbf16>
    %cst_80 = arith.constant dense<0.000000e+00> : vector<2x16xf32>
    %160 = tpu.matmul %158, %159, %cst_80 {dimension_numbers = #tpu.dot_dimension_numbers<[1], [1], [0], [0], [0, 0, 1, 0], [], []>} : vector<2x8xbf16>, vector<16x8xbf16>, vector<2x16xf32> -> vector<2x16xf32>
    %cst_81 = arith.constant dense<0xFF800000> : vector<2xf32>
    %161 = vector.multi_reduction <maximumf>, %160, %cst_81 [1] : vector<2x16xf32> to vector<2xf32>
    %162 = vector.shape_cast %161 : vector<2xf32> to vector<2x1xf32>
    %163 = vector.broadcast %162 : vector<2x1xf32> to vector<2x16xf32>
    %164 = arith.subf %160, %163 : vector<2x16xf32>
    %165 = math.exp %164 : vector<2x16xf32>
    %cst_82 = arith.constant dense<0.000000e+00> : vector<2xf32>
    %166 = vector.multi_reduction <add>, %165, %cst_82 [1] : vector<2x16xf32> to vector<2xf32>
    %167 = vector.shape_cast %166 : vector<2xf32> to vector<2x1xf32>
    %168 = tpu.reciprocal %167 {approx = true} : vector<2x1xf32> -> vector<2x1xf32>
    %169 = vector.broadcast %168 : vector<2x1xf32> to vector<2x16xf32>
    %170 = arith.mulf %165, %169 : vector<2x16xf32>
    %171 = arith.truncf %170 : vector<2x16xf32> to vector<2x16xbf16>
    %172 = vector.extract_strided_slice %139 {offsets = [0, 8], sizes = [16, 8], strides = [1, 1]} : vector<16x32xbf16> to vector<16x8xbf16>
    %cst_83 = arith.constant dense<0.000000e+00> : vector<2x8xf32>
    %173 = tpu.matmul %171, %172, %cst_83 {dimension_numbers = #tpu.dot_dimension_numbers<[1], [0], [0], [1], [0, 0, 1, 1], [], []>} : vector<2x16xbf16>, vector<16x8xbf16>, vector<2x8xf32> -> vector<2x8xf32>
    %174 = arith.truncf %173 : vector<2x8xf32> to vector<2x8xbf16>
    %c0_84 = arith.constant 0 : index
    %c8 = arith.constant 8 : index
    %175 = vector.load %arg27[%c0_84, %c8] : memref<2x32xbf16, #tpu.memory_space<vmem>>, vector<2x8xbf16>
    tpu.vector_store %arg27[%c0_84, %c8], %174 {strides = array<i32>} : memref<2x32xbf16, #tpu.memory_space<vmem>>, vector<2x8xbf16>,
    %176 = vector.extract_strided_slice %127 {offsets = [0, 16], sizes = [2, 8], strides = [1, 1]} : vector<2x32xbf16> to vector<2x8xbf16>
    %177 = vector.extract_strided_slice %133 {offsets = [0, 16], sizes = [16, 8], strides = [1, 1]} : vector<16x32xbf16> to vector<16x8xbf16>
    %cst_85 = arith.constant dense<0.000000e+00> : vector<2x16xf32>
    %178 = tpu.matmul %176, %177, %cst_85 {dimension_numbers = #tpu.dot_dimension_numbers<[1], [1], [0], [0], [0, 0, 1, 0], [], []>} : vector<2x8xbf16>, vector<16x8xbf16>, vector<2x16xf32> -> vector<2x16xf32>
    %cst_86 = arith.constant dense<0xFF800000> : vector<2xf32>
    %179 = vector.multi_reduction <maximumf>, %178, %cst_86 [1] : vector<2x16xf32> to vector<2xf32>
    %180 = vector.shape_cast %179 : vector<2xf32> to vector<2x1xf32>
    %181 = vector.broadcast %180 : vector<2x1xf32> to vector<2x16xf32>
    %182 = arith.subf %178, %181 : vector<2x16xf32>
    %183 = math.exp %182 : vector<2x16xf32>
    %cst_87 = arith.constant dense<0.000000e+00> : vector<2xf32>
    %184 = vector.multi_reduction <add>, %183, %cst_87 [1] : vector<2x16xf32> to vector<2xf32>
    %185 = vector.shape_cast %184 : vector<2xf32> to vector<2x1xf32>
    %186 = tpu.reciprocal %185 {approx = true} : vector<2x1xf32> -> vector<2x1xf32>
    %187 = vector.broadcast %186 : vector<2x1xf32> to vector<2x16xf32>
    %188 = arith.mulf %183, %187 : vector<2x16xf32>
    %189 = arith.truncf %188 : vector<2x16xf32> to vector<2x16xbf16>
    %190 = vector.extract_strided_slice %139 {offsets = [0, 16], sizes = [16, 8], strides = [1, 1]} : vector<16x32xbf16> to vector<16x8xbf16>
    %cst_88 = arith.constant dense<0.000000e+00> : vector<2x8xf32>
    %191 = tpu.matmul %189, %190, %cst_88 {dimension_numbers = #tpu.dot_dimension_numbers<[1], [0], [0], [1], [0, 0, 1, 1], [], []>} : vector<2x16xbf16>, vector<16x8xbf16>, vector<2x8xf32> -> vector<2x8xf32>
    %192 = arith.truncf %191 : vector<2x8xf32> to vector<2x8xbf16>
    %c0_89 = arith.constant 0 : index
    %c16 = arith.constant 16 : index
    %193 = vector.load %arg27[%c0_89, %c16] : memref<2x32xbf16, #tpu.memory_space<vmem>>, vector<2x8xbf16>
    tpu.vector_store %arg27[%c0_89, %c16], %192 {strides = array<i32>} : memref<2x32xbf16, #tpu.memory_space<vmem>>, vector<2x8xbf16>,
    %194 = vector.extract_strided_slice %127 {offsets = [0, 24], sizes = [2, 8], strides = [1, 1]} : vector<2x32xbf16> to vector<2x8xbf16>
    %195 = vector.extract_strided_slice %133 {offsets = [0, 24], sizes = [16, 8], strides = [1, 1]} : vector<16x32xbf16> to vector<16x8xbf16>
    %cst_90 = arith.constant dense<0.000000e+00> : vector<2x16xf32>
    %196 = tpu.matmul %194, %195, %cst_90 {dimension_numbers = #tpu.dot_dimension_numbers<[1], [1], [0], [0], [0, 0, 1, 0], [], []>} : vector<2x8xbf16>, vector<16x8xbf16>, vector<2x16xf32> -> vector<2x16xf32>
    %cst_91 = arith.constant dense<0xFF800000> : vector<2xf32>
    %197 = vector.multi_reduction <maximumf>, %196, %cst_91 [1] : vector<2x16xf32> to vector<2xf32>
    %198 = vector.shape_cast %197 : vector<2xf32> to vector<2x1xf32>
    %199 = vector.broadcast %198 : vector<2x1xf32> to vector<2x16xf32>
    %200 = arith.subf %196, %199 : vector<2x16xf32>
    %201 = math.exp %200 : vector<2x16xf32>
    %cst_92 = arith.constant dense<0.000000e+00> : vector<2xf32>
    %202 = vector.multi_reduction <add>, %201, %cst_92 [1] : vector<2x16xf32> to vector<2xf32>
    %203 = vector.shape_cast %202 : vector<2xf32> to vector<2x1xf32>
    %204 = tpu.reciprocal %203 {approx = true} : vector<2x1xf32> -> vector<2x1xf32>
    %205 = vector.broadcast %204 : vector<2x1xf32> to vector<2x16xf32>
    %206 = arith.mulf %201, %205 : vector<2x16xf32>
    %207 = arith.truncf %206 : vector<2x16xf32> to vector<2x16xbf16>
    %208 = vector.extract_strided_slice %139 {offsets = [0, 24], sizes = [16, 8], strides = [1, 1]} : vector<16x32xbf16> to vector<16x8xbf16>
    %cst_93 = arith.constant dense<0.000000e+00> : vector<2x8xf32>
    %209 = tpu.matmul %207, %208, %cst_93 {dimension_numbers = #tpu.dot_dimension_numbers<[1], [0], [0], [1], [0, 0, 1, 1], [], []>} : vector<2x16xbf16>, vector<16x8xbf16>, vector<2x8xf32> -> vector<2x8xf32>
    %210 = arith.truncf %209 : vector<2x8xf32> to vector<2x8xbf16>
    %c0_94 = arith.constant 0 : index
    %c24 = arith.constant 24 : index
    %211 = vector.load %arg27[%c0_94, %c24] : memref<2x32xbf16, #tpu.memory_space<vmem>>, vector<2x8xbf16>
    tpu.vector_store %arg27[%c0_94, %c24], %210 {strides = array<i32>} : memref<2x32xbf16, #tpu.memory_space<vmem>>, vector<2x8xbf16>,
    %c0_95 = arith.constant 0 : index
    %c0_96 = arith.constant 0 : index
    %212 = vector.load %arg27[%c0_95, %c0_96] : memref<2x32xbf16, #tpu.memory_space<vmem>>, vector<2x32xbf16>
    %c0_97 = arith.constant 0 : index
    %c0_98 = arith.constant 0 : index
    %213 = vector.load %arg24[%c0_97, %c0_98] : memref<32x32xbf16, #tpu.memory_space<vmem>>, vector<32x32xbf16>
    %cst_99 = arith.constant dense<0.000000e+00> : vector<2x32xf32>
    %214 = tpu.matmul %212, %213, %cst_99 {dimension_numbers = #tpu.dot_dimension_numbers<[1], [1], [0], [0], [0, 0, 1, 0], [], []>} : vector<2x32xbf16>, vector<32x32xbf16>, vector<2x32xf32> -> vector<2x32xf32>
    %c0_100 = arith.constant 0 : index
    %c0_101 = arith.constant 0 : index
    %215 = vector.load %arg25[%c0_100, %c0_101] : memref<1x32xf32, #tpu.memory_space<vmem>>, vector<1x32xf32>
    %216 = vector.broadcast %215 : vector<1x32xf32> to vector<2x32xf32>
    %217 = arith.addf %214, %216 : vector<2x32xf32>
    %c0_102 = arith.constant 0 : index
    %c0_103 = arith.constant 0 : index
    %c0_104 = arith.constant 0 : index
    %218 = vector.load %arg26[%c0_102, %c0_103, %c0_104] : memref<1x2x32xf32, #tpu.memory_space<vmem>>, vector<1x2x32xf32>
    %219 = vector.shape_cast %218 : vector<1x2x32xf32> to vector<2x32xf32>
    %220 = vector.shape_cast %217 : vector<2x32xf32> to vector<1x2x32xf32>
    tpu.vector_store %arg26[%c0_102, %c0_103, %c0_104], %220 {strides = array<i32>} : memref<1x2x32xf32, #tpu.memory_space<vmem>>, vector<1x2x32xf32>,
    return
  }
  func.func @transform_0(%arg0: i32) -> (i32, i32, i32) {
    %c0_i32 = arith.constant 0 : i32
    %c0_i32_0 = arith.constant 0 : i32
    %c0_i32_1 = arith.constant 0 : i32
    return %arg0, %c0_i32, %c0_i32_0 : i32, i32, i32
  }
  func.func @transform_1(%arg0: i32) -> (i32, i32) {
    %c0_i32 = arith.constant 0 : i32
    %c0_i32_0 = arith.constant 0 : i32
    %c0_i32_1 = arith.constant 0 : i32
    return %c0_i32, %c0_i32_0 : i32, i32
  }
  func.func @transform_2(%arg0: i32) -> (i32, i32) {
    %c0_i32 = arith.constant 0 : i32
    %c0_i32_0 = arith.constant 0 : i32
    %c0_i32_1 = arith.constant 0 : i32
    return %c0_i32, %c0_i32_0 : i32, i32
  }
  func.func @transform_3(%arg0: i32) -> (i32, i32) {
    %c0_i32 = arith.constant 0 : i32
    %c0_i32_0 = arith.constant 0 : i32
    %c0_i32_1 = arith.constant 0 : i32
    return %c0_i32, %c0_i32_0 : i32, i32
  }
  func.func @transform_4(%arg0: i32) -> (i32, i32) {
    %c0_i32 = arith.constant 0 : i32
    %c0_i32_0 = arith.constant 0 : i32
    %c0_i32_1 = arith.constant 0 : i32
    return %c0_i32, %c0_i32_0 : i32, i32
  }
  func.func @transform_5(%arg0: i32) -> (i32, i32) {
    %c0_i32 = arith.constant 0 : i32
    %c0_i32_0 = arith.constant 0 : i32
    %c0_i32_1 = arith.constant 0 : i32
    return %c0_i32, %c0_i32_0 : i32, i32
  }
  func.func @transform_6(%arg0: i32) -> (i32, i32) {
    %c0_i32 = arith.constant 0 : i32
    %c0_i32_0 = arith.constant 0 : i32
    %c0_i32_1 = arith.constant 0 : i32
    return %c0_i32, %c0_i32_0 : i32, i32
  }
  func.func @transform_7(%arg0: i32) -> (i32, i32) {
    %c0_i32 = arith.constant 0 : i32
    %c0_i32_0 = arith.constant 0 : i32
    %c0_i32_1 = arith.constant 0 : i32
    return %c0_i32, %c0_i32_0 : i32, i32
  }
  func.func @transform_8(%arg0: i32) -> (i32, i32) {
    %c0_i32 = arith.constant 0 : i32
    %c0_i32_0 = arith.constant 0 : i32
    %c0_i32_1 = arith.constant 0 : i32
    return %c0_i32, %c0_i32_0 : i32, i32
  }
  func.func @transform_9(%arg0: i32) -> (i32, i32) {
    %c0_i32 = arith.constant 0 : i32
    %c0_i32_0 = arith.constant 0 : i32
    %c0_i32_1 = arith.constant 0 : i32
    return %c0_i32, %c0_i32_0 : i32, i32
  }
  func.func @transform_10(%arg0: i32) -> (i32, i32) {
    %c0_i32 = arith.constant 0 : i32
    %c0_i32_0 = arith.constant 0 : i32
    %c0_i32_1 = arith.constant 0 : i32
    return %c0_i32, %c0_i32_0 : i32, i32
  }
  func.func @transform_11(%arg0: i32) -> (i32, i32) {
    %c0_i32 = arith.constant 0 : i32
    %c0_i32_0 = arith.constant 0 : i32
    %c0_i32_1 = arith.constant 0 : i32
    return %c0_i32, %c0_i32_0 : i32, i32
  }
  func.func @transform_12(%arg0: i32) -> (i32, i32) {
    %c0_i32 = arith.constant 0 : i32
    %c0_i32_0 = arith.constant 0 : i32
    %c0_i32_1 = arith.constant 0 : i32
    return %c0_i32, %c0_i32_0 : i32, i32
  }
  func.func @transform_13(%arg0: i32) -> (i32, i32) {
    %c0_i32 = arith.constant 0 : i32
    %c0_i32_0 = arith.constant 0 : i32
    %c0_i32_1 = arith.constant 0 : i32
    return %c0_i32, %c0_i32_0 : i32, i32
  }
  func.func @transform_14(%arg0: i32) -> (i32, i32) {
    %c0_i32 = arith.constant 0 : i32
    %c0_i32_0 = arith.constant 0 : i32
    %c0_i32_1 = arith.constant 0 : i32
    return %c0_i32, %c0_i32_0 : i32, i32
  }
  func.func @transform_15(%arg0: i32) -> (i32, i32) {
    %c0_i32 = arith.constant 0 : i32
    %c0_i32_0 = arith.constant 0 : i32
    %c0_i32_1 = arith.constant 0 : i32
    return %c0_i32, %c0_i32_0 : i32, i32
  }
  func.func @transform_16(%arg0: i32) -> (i32, i32) {
    %c0_i32 = arith.constant 0 : i32
    %c0_i32_0 = arith.constant 0 : i32
    %c0_i32_1 = arith.constant 0 : i32
    return %c0_i32, %c0_i32_0 : i32, i32
  }
  func.func @transform_17(%arg0: i32) -> (i32, i32) {
    %c0_i32 = arith.constant 0 : i32
    %c0_i32_0 = arith.constant 0 : i32
    %c0_i32_1 = arith.constant 0 : i32
    return %c0_i32, %c0_i32_0 : i32, i32
  }
  func.func @transform_18(%arg0: i32) -> (i32, i32) {
    %c0_i32 = arith.constant 0 : i32
    %c0_i32_0 = arith.constant 0 : i32
    %c0_i32_1 = arith.constant 0 : i32
    return %c0_i32, %c0_i32_0 : i32, i32
  }
  func.func @transform_19(%arg0: i32) -> (i32, i32) {
    %c0_i32 = arith.constant 0 : i32
    %c0_i32_0 = arith.constant 0 : i32
    %c0_i32_1 = arith.constant 0 : i32
    return %c0_i32, %c0_i32_0 : i32, i32
  }
  func.func @transform_20(%arg0: i32) -> (i32, i32) {
    %c0_i32 = arith.constant 0 : i32
    %c0_i32_0 = arith.constant 0 : i32
    %c0_i32_1 = arith.constant 0 : i32
    return %c0_i32, %c0_i32_0 : i32, i32
  }
  func.func @transform_21(%arg0: i32) -> (i32, i32) {
    %c0_i32 = arith.constant 0 : i32
    %c0_i32_0 = arith.constant 0 : i32
    %c0_i32_1 = arith.constant 0 : i32
    return %c0_i32, %c0_i32_0 : i32, i32
  }
  func.func @transform_22(%arg0: i32) -> (i32, i32) {
    %c0_i32 = arith.constant 0 : i32
    %c0_i32_0 = arith.constant 0 : i32
    %c0_i32_1 = arith.constant 0 : i32
    return %c0_i32, %c0_i32_0 : i32, i32
  }
  func.func @transform_23(%arg0: i32) -> (i32, i32) {
    %c0_i32 = arith.constant 0 : i32
    %c0_i32_0 = arith.constant 0 : i32
    %c0_i32_1 = arith.constant 0 : i32
    return %c0_i32, %c0_i32_0 : i32, i32
  }
  func.func @transform_24(%arg0: i32) -> (i32, i32) {
    %c0_i32 = arith.constant 0 : i32
    %c0_i32_0 = arith.constant 0 : i32
    %c0_i32_1 = arith.constant 0 : i32
    return %c0_i32, %c0_i32_0 : i32, i32
  }
  func.func @transform_25(%arg0: i32) -> (i32, i32, i32) {
    %c0_i32 = arith.constant 0 : i32
    %c0_i32_0 = arith.constant 0 : i32
    %c0_i32_1 = arith.constant 0 : i32
    return %arg0, %c0_i32, %c0_i32_0 : i32, i32, i32
  }
}

</mosaic_0001>

<llo_original>
// kernel: tpu_custom_call.1
$region0: #{tpu_custom_call.1}
  #allocation0 [shape = 'u32[]', space=smem, size = 0x4, offset = 0x4, fixed_abs, tag = 'smem constant byte address 0x4 - core index']
  #allocation1 [shape = 'u32[72,128]{1,0:T(1,128)}', space=vmem, size = 0x9000, scoped, tag = 'internal scratch']
  #allocation2 [shape = 'bf16[2,32]{1,0:T(2,128)(2,1)}', space=vmem, size = 0x200, scoped, tag = 'scratch operand']
  %s0 = inlined_call_operand.vmem [shape: bf16[2,16,32], index: 0, kind: input, shape index: {}]
  %s1 = inlined_call_operand.hbm [shape: bf16[2,16], index: 1, kind: input, shape index: {}]
  %s2 = inlined_call_operand.vmem [shape: f32[2,1], index: 2, kind: input, shape index: {}]
  %s3 = inlined_call_operand.hbm [shape: bf16[2,2], index: 3, kind: input, shape index: {}]
  %s4 = inlined_call_operand.vmem [shape: f32[2,1], index: 4, kind: input, shape index: {}]
  %s5 = inlined_call_operand.vmem [shape: f32[2,1], index: 5, kind: input, shape index: {}]
  %s6 = inlined_call_operand.vmem [shape: f32[2,1], index: 6, kind: input, shape index: {}]
  %s7 = inlined_call_operand.vmem [shape: bf16[64,32], index: 7, kind: input, shape index: {}]
  %s8 = inlined_call_operand.hbm [shape: f32[1,64], index: 8, kind: input, shape index: {}]
  %s9 = inlined_call_operand.vmem [shape: bf16[32,32], index: 9, kind: input, shape index: {}]
  %s10 = inlined_call_operand.hbm [shape: f32[1,32], index: 10, kind: input, shape index: {}]
  %s11 = inlined_call_operand.hbm [shape: f32[1,32], index: 11, kind: input, shape index: {}]
  %s12 = inlined_call_operand.hbm [shape: f32[1,32], index: 12, kind: input, shape index: {}]
  %s13 = inlined_call_operand.vmem [shape: bf16[32,32], index: 13, kind: input, shape index: {}]
  %s14 = inlined_call_operand.hbm [shape: f32[1,32], index: 14, kind: input, shape index: {}]
  %s15 = inlined_call_operand.hbm [shape: f32[1,32], index: 15, kind: input, shape index: {}]
  %s16 = inlined_call_operand.hbm [shape: f32[1,32], index: 16, kind: input, shape index: {}]
  %s17 = inlined_call_operand.hbm [shape: bf16[32,32], index: 17, kind: input, shape index: {}]
  %s18 = inlined_call_operand.hbm [shape: f32[1,32], index: 18, kind: input, shape index: {}]
  %s19 = inlined_call_operand.hbm [shape: bf16[32,32], index: 19, kind: input, shape index: {}]
  %s20 = inlined_call_operand.hbm [shape: f32[1,32], index: 20, kind: input, shape index: {}]
  %s21 = inlined_call_operand.vmem [shape: bf16[32,32], index: 21, kind: input, shape index: {}]
  %s22 = inlined_call_operand.vmem [shape: f32[1,32], index: 22, kind: input, shape index: {}]
  %s23 = inlined_call_operand.hbm [shape: bf16[32,32], index: 23, kind: input, shape index: {}]
  %s24 = inlined_call_operand.vmem [shape: f32[1,32], index: 24, kind: input, shape index: {}]
  %s25 = inlined_call_operand.hbm [shape: f32[2,2,32], index: 25, kind: output, shape index: {}]
  %s26 = sld [smem:[#allocation0]]
  $region189: #{tpu_custom_call.1} parent=0
    _
  %s28 = ssub.s32 1, %s26
  %s29 = scalar_select 0, %s28, %s26
  $region1: #{tpu_custom_call.1} parent=0
    #allocation3 [shape = 'u8[512]{0}', space=vmem, size = 0x400, scoped, tag = 'input window, operand 1, single buffered']
    #allocation4 [shape = 's32[2]{0}', space=sflag, size = 0x8, scoped, tag = 'scoped memory for tpu_custom_call.1']
    #allocation5 [shape = 's32[2]{0}', space=sflag, size = 0x8, scoped, tag = 'scoped memory for tpu_custom_call.1']
    #allocation6 [shape = 'u8[512]{0}', space=vmem, size = 0x400, scoped, tag = 'input window, operand 3, single buffered']
    #allocation7 [shape = 's32[1]{0}', space=sflag, size = 0x4, scoped, tag = 'scoped memory for tpu_custom_call.1']
    #allocation8 [shape = 'u8[512]{0}', space=vmem, size = 0x400, scoped, tag = 'input window, operand 8, single buffered']
    #allocation9 [shape = 'u8[512]{0}', space=vmem, size = 0x400, scoped, tag = 'input window, operand 10, single buffered']
    #allocation10 [shape = 's32[1]{0}', space=sflag, size = 0x4, scoped, tag = 'scoped memory for tpu_custom_call.1']
    #allocation11 [shape = 'u8[512]{0}', space=vmem, size = 0x400, scoped, tag = 'input window, operand 11, single buffered']
    #allocation12 [shape = 'u8[512]{0}', space=vmem, size = 0x400, scoped, tag = 'input window, operand 12, single buffered']
    #allocation13 [shape = 's32[1]{0}', space=sflag, size = 0x4, scoped, tag = 'scoped memory for tpu_custom_call.1']
    #allocation14 [shape = 'u8[512]{0}', space=vmem, size = 0x400, scoped, tag = 'input window, operand 14, single buffered']
    #allocation15 [shape = 'u8[512]{0}', space=vmem, size = 0x400, scoped, tag = 'input window, operand 15, single buffered']
    #allocation16 [shape = 's32[1]{0}', space=sflag, size = 0x4, scoped, tag = 'scoped memory for tpu_custom_call.1']
    #allocation17 [shape = 'u8[512]{0}', space=vmem, size = 0x400, scoped, tag = 'input window, operand 16, single buffered']
    #allocation18 [shape = 'u8[8192]{0}', space=vmem, size = 0x2000, scoped, tag = 'input window, operand 17, single buffered']
    #allocation19 [shape = 's32[1]{0}', space=sflag, size = 0x4, scoped, tag = 'scoped memory for tpu_custom_call.1']
    #allocation20 [shape = 'u8[512]{0}', space=vmem, size = 0x400, scoped, tag = 'input window, operand 18, single buffered']
    #allocation21 [shape = 'u8[8192]{0}', space=vmem, size = 0x2000, scoped, tag = 'input window, operand 19, single buffered']
    #allocation22 [shape = 's32[1]{0}', space=sflag, size = 0x4, scoped, tag = 'scoped memory for tpu_custom_call.1']
    #allocation23 [shape = 'u8[512]{0}', space=vmem, size = 0x400, scoped, tag = 'input window, operand 20, single buffered']
    #allocation24 [shape = 'u8[8192]{0}', space=vmem, size = 0x2000, scoped, tag = 'input window, operand 23, single buffered']
    #allocation25 [shape = 's32[1]{0}', space=sflag, size = 0x4, scoped, tag = 'scoped memory for tpu_custom_call.1']
    #allocation26 [shape = 'u8[2048]{0}', space=vmem, size = 0x800, scoped, tag = 'output window, operand 0']
    %30 = vsyncpa [#allocation4], 0
    %31 = vsyncpa [#allocation7], 0
    %32 = vsyncpa [#allocation10], 0
    %33 = vsyncpa [#allocation13], 0
    %34 = vsyncpa [#allocation16], 0
    %35 = vsyncpa [#allocation19], 0
    %36 = vsyncpa [#allocation22], 0
    %37 = vsyncpa [#allocation25], 0
    %38 = vsyncpa [#allocation5], 0
    %s39 = scalar_lea.sflag [#allocation5], 1
    %40 = vsyncpa %s39, 0
    loop: start=0, step=1, limit=4
    $region2: #{tpu_custom_call.1} parent=1 // loop_pre_header
      _
    $region3: #{tpu_custom_call.1} parent=1 // loop_header
      %s42 = sphi 0, %s46
      %p43 = scmp.ge.s32.totalorder %s42, 4
      %s52 = sphi 0, %s54
      %s55 = sphi 0, %s52
      %s56 = sphi 0, %s55
      %s72 = sphi 0, %s56
      %s76 = sphi 0, %s76
      %s78 = sphi 0, %s76
      %s79 = sphi 0, %s78
      %s93 = sphi 0, %s79
      %s97 = sphi 0, %s97
      %s99 = sphi 0, %s97
      %s100 = sphi 0, %s99
      %s114 = sphi 0, %s100
      %s118 = sphi 0, %s118
      %s120 = sphi 0, %s118
      %s121 = sphi 0, %s120
      %s135 = sphi 0, %s121
      %s139 = sphi 0, %s139
      %s141 = sphi 0, %s139
      %s142 = sphi 0, %s141
      %s156 = sphi 0, %s142
      %s160 = sphi 0, %s160
      %s162 = sphi 0, %s160
      %s163 = sphi 0, %s162
      %s177 = sphi 0, %s163
      %s181 = sphi 0, %s181
      %s183 = sphi 0, %s181
      %s184 = sphi 0, %s183
      %s198 = sphi 0, %s184
      %s202 = sphi 0, %s202
      %s204 = sphi 0, %s202
      %s205 = sphi 0, %s204
      %s219 = sphi 0, %s205
      %s223 = sphi 0, %s223
      %s225 = sphi 0, %s223
      %s226 = sphi 0, %s225
      %s240 = sphi 0, %s226
      %s244 = sphi 0, %s244
      %s246 = sphi 0, %s244
      %s247 = sphi 0, %s246
      %s261 = sphi 0, %s247
      %s265 = sphi 0, %s265
      %s267 = sphi 0, %s265
      %s268 = sphi 0, %s267
      %s282 = sphi 0, %s268
      %s286 = sphi 0, %s286
      %s288 = sphi 0, %s286
      %s289 = sphi 0, %s288
      %s303 = sphi 0, %s289
      %s307 = sphi 0, %s307
      %s309 = sphi 0, %s307
      %s310 = sphi 0, %s309
      %s324 = sphi 0, %s310
      %s328 = sphi 0, %s328
      %s330 = sphi 0, %s328
      %s331 = sphi 0, %s330
      %s345 = sphi 0, %s331
      %s349 = sphi 0, %s349
      %s351 = sphi 0, %s349
      %s352 = sphi 0, %s351
      %s366 = sphi 0, %s352
      %s370 = sphi 0, %s370
      %s372 = sphi 0, %s370
      %s373 = sphi 0, %s372
      %s387 = sphi 0, %s373
      %s391 = sphi 0, %s391
      %s393 = sphi 0, %s391
      %s394 = sphi 0, %s393
      %s408 = sphi 0, %s394
      %s412 = sphi 0, %s412
      %s414 = sphi 0, %s412
      %s415 = sphi 0, %s414
      %s429 = sphi 0, %s415
      %s433 = sphi 0, %s433
      %s435 = sphi 0, %s433
      %s436 = sphi 0, %s435
      %s450 = sphi 0, %s436
      %s454 = sphi 0, %s454
      %s456 = sphi 0, %s454
      %s457 = sphi 0, %s456
      %s471 = sphi 0, %s457
      %s475 = sphi 0, %s475
      %s477 = sphi 0, %s475
      %s478 = sphi 0, %s477
      %s492 = sphi 0, %s478
      %s496 = sphi 0, %s496
      %s498 = sphi 0, %s496
      %s499 = sphi 0, %s498
      %s513 = sphi 0, %s499
      %s517 = sphi 0, %s517
      %s519 = sphi 0, %s517
      %s520 = sphi 0, %s519
      %s534 = sphi 0, %s520
      %s538 = sphi 0, %s538
      %s540 = sphi 0, %s538
      %s541 = sphi 0, %s540
      %s555 = sphi 0, %s541
      %s559 = sphi 0, %s559
      %s561 = sphi 0, %s559
      %s562 = sphi 0, %s561
      %s576 = sphi 0, %s562
      %s582 = sphi 0, %s584
      %s585 = sphi 0, %s582
      %s586 = sphi 0, %s585
      %s602 = sphi 0, %s586
    $region4: #{tpu_custom_call.1} parent=1 // loop_header_branch
      %45 = sbr.rel (%p43) target = $region8
    $region5: #{tpu_custom_call.1} parent=1 // loop_body
      %s47 = ssub.s32 %s42, 1
      %s48 = ssub.s32 %s42, 2
      %s49 = sadd.s32 %s42, 1
      %s50 = ssub.s32 %s42, %s49
      %p51 = scmp.eq.s32.totalorder %s50, 0
      %s53 = sadd.s32 %s52, 1
      %s54 = scalar_select %p51, %s52, %s53
      %p57 = pneg %p51
      %p58 = scmp.eq.s32.totalorder %s42, 1
      %p59 = por %p57, %p58
      %p60 = scmp.ne.s32.totalorder %s52, %s55
      %p61 = scmp.eq.s32.totalorder %s42, 0
      %p62 = por %p60, %p61
      %p63 = scmp.ne.s32.totalorder %s52, %s55
      %p64 = scmp.eq.s32.totalorder %s47, 1
      %p65 = por %p63, %p64
      %p66 = scmp.ne.s32.totalorder %s55, %s56
      %p67 = scmp.eq.s32.totalorder %s47, 0
      %p68 = por %p66, %p67
      %p69 = scmp.ne.s32.totalorder %s55, %s56
      %p70 = scmp.eq.s32.totalorder %s48, 1
      %p71 = por %p69, %p70
      %p73 = scmp.ne.s32.totalorder %s56, %s72
      %p74 = scmp.eq.s32.totalorder %s48, 0
      %p75 = por %p73, %p74
      %s77 = sadd.s32 %s76, 1
      %p80 = scmp.eq.s32.totalorder %s42, 1
      %p81 = scmp.ne.s32.totalorder %s76, %s78
      %p82 = scmp.eq.s32.totalorder %s42, 0
      %p83 = por %p81, %p82
      %p84 = scmp.ne.s32.totalorder %s76, %s78
      %p85 = scmp.eq.s32.totalorder %s47, 1
      %p86 = por %p84, %p85
      %p87 = scmp.ne.s32.totalorder %s78, %s79
      %p88 = scmp.eq.s32.totalorder %s47, 0
      %p89 = por %p87, %p88
      %p90 = scmp.ne.s32.totalorder %s78, %s79
      %p91 = scmp.eq.s32.totalorder %s48, 1
      %p92 = por %p90, %p91
      %p94 = scmp.ne.s32.totalorder %s79, %s93
      %p95 = scmp.eq.s32.totalorder %s48, 0
      %p96 = por %p94, %p95
      %s98 = sadd.s32 %s97, 1
      %p101 = scmp.eq.s32.totalorder %s42, 1
      %p102 = scmp.ne.s32.totalorder %s97, %s99
      %p103 = scmp.eq.s32.totalorder %s42, 0
      %p104 = por %p102, %p103
      %p105 = scmp.ne.s32.totalorder %s97, %s99
      %p106 = scmp.eq.s32.totalorder %s47, 1
      %p107 = por %p105, %p106
      %p108 = scmp.ne.s32.totalorder %s99, %s100
      %p109 = scmp.eq.s32.totalorder %s47, 0
      %p110 = por %p108, %p109
      %p111 = scmp.ne.s32.totalorder %s99, %s100
      %p112 = scmp.eq.s32.totalorder %s48, 1
      %p113 = por %p111, %p112
      %p115 = scmp.ne.s32.totalorder %s100, %s114
      %p116 = scmp.eq.s32.totalorder %s48, 0
      %p117 = por %p115, %p116
      %s119 = sadd.s32 %s118, 1
      %p122 = scmp.eq.s32.totalorder %s42, 1
      %p123 = scmp.ne.s32.totalorder %s118, %s120
      %p124 = scmp.eq.s32.totalorder %s42, 0
      %p125 = por %p123, %p124
      %p126 = scmp.ne.s32.totalorder %s118, %s120
      %p127 = scmp.eq.s32.totalorder %s47, 1
      %p128 = por %p126, %p127
      %p129 = scmp.ne.s32.totalorder %s120, %s121
      %p130 = scmp.eq.s32.totalorder %s47, 0
      %p131 = por %p129, %p130
      %p132 = scmp.ne.s32.totalorder %s120, %s121
      %p133 = scmp.eq.s32.totalorder %s48, 1
      %p134 = por %p132, %p133
      %p136 = scmp.ne.s32.totalorder %s121, %s135
      %p137 = scmp.eq.s32.totalorder %s48, 0
      %p138 = por %p136, %p137
      %s140 = sadd.s32 %s139, 1
      %p143 = scmp.eq.s32.totalorder %s42, 1
      %p144 = scmp.ne.s32.totalorder %s139, %s141
      %p145 = scmp.eq.s32.totalorder %s42, 0
      %p146 = por %p144, %p145
      %p147 = scmp.ne.s32.totalorder %s139, %s141
      %p148 = scmp.eq.s32.totalorder %s47, 1
      %p149 = por %p147, %p148
      %p150 = scmp.ne.s32.totalorder %s141, %s142
      %p151 = scmp.eq.s32.totalorder %s47, 0
      %p152 = por %p150, %p151
      %p153 = scmp.ne.s32.totalorder %s141, %s142
      %p154 = scmp.eq.s32.totalorder %s48, 1
      %p155 = por %p153, %p154
      %p157 = scmp.ne.s32.totalorder %s142, %s156
      %p158 = scmp.eq.s32.totalorder %s48, 0
      %p159 = por %p157, %p158
      %s161 = sadd.s32 %s160, 1
      %p164 = scmp.eq.s32.totalorder %s42, 1
      %p165 = scmp.ne.s32.totalorder %s160, %s162
      %p166 = scmp.eq.s32.totalorder %s42, 0
      %p167 = por %p165, %p166
      %p168 = scmp.ne.s32.totalorder %s160, %s162
      %p169 = scmp.eq.s32.totalorder %s47, 1
      %p170 = por %p168, %p169
      %p171 = scmp.ne.s32.totalorder %s162, %s163
      %p172 = scmp.eq.s32.totalorder %s47, 0
      %p173 = por %p171, %p172
      %p174 = scmp.ne.s32.totalorder %s162, %s163
      %p175 = scmp.eq.s32.totalorder %s48, 1
      %p176 = por %p174, %p175
      %p178 = scmp.ne.s32.totalorder %s163, %s177
      %p179 = scmp.eq.s32.totalorder %s48, 0
      %p180 = por %p178, %p179
      %s182 = sadd.s32 %s181, 1
      %p185 = scmp.eq.s32.totalorder %s42, 1
      %p186 = scmp.ne.s32.totalorder %s181, %s183
      %p187 = scmp.eq.s32.totalorder %s42, 0
      %p188 = por %p186, %p187
      %p189 = scmp.ne.s32.totalorder %s181, %s183
      %p190 = scmp.eq.s32.totalorder %s47, 1
      %p191 = por %p189, %p190
      %p192 = scmp.ne.s32.totalorder %s183, %s184
      %p193 = scmp.eq.s32.totalorder %s47, 0
      %p194 = por %p192, %p193
      %p195 = scmp.ne.s32.totalorder %s183, %s184
      %p196 = scmp.eq.s32.totalorder %s48, 1
      %p197 = por %p195, %p196
      %p199 = scmp.ne.s32.totalorder %s184, %s198
      %p200 = scmp.eq.s32.totalorder %s48, 0
      %p201 = por %p199, %p200
      %s203 = sadd.s32 %s202, 1
      %p206 = scmp.eq.s32.totalorder %s42, 1
      %p207 = scmp.ne.s32.totalorder %s202, %s204
      %p208 = scmp.eq.s32.totalorder %s42, 0
      %p209 = por %p207, %p208
      %p210 = scmp.ne.s32.totalorder %s202, %s204
      %p211 = scmp.eq.s32.totalorder %s47, 1
      %p212 = por %p210, %p211
      %p213 = scmp.ne.s32.totalorder %s204, %s205
      %p214 = scmp.eq.s32.totalorder %s47, 0
      %p215 = por %p213, %p214
      %p216 = scmp.ne.s32.totalorder %s204, %s205
      %p217 = scmp.eq.s32.totalorder %s48, 1
      %p218 = por %p216, %p217
      %p220 = scmp.ne.s32.totalorder %s205, %s219
      %p221 = scmp.eq.s32.totalorder %s48, 0
      %p222 = por %p220, %p221
      %s224 = sadd.s32 %s223, 1
      %p227 = scmp.eq.s32.totalorder %s42, 1
      %p228 = scmp.ne.s32.totalorder %s223, %s225
      %p229 = scmp.eq.s32.totalorder %s42, 0
      %p230 = por %p228, %p229
      %p231 = scmp.ne.s32.totalorder %s223, %s225
      %p232 = scmp.eq.s32.totalorder %s47, 1
      %p233 = por %p231, %p232
      %p234 = scmp.ne.s32.totalorder %s225, %s226
      %p235 = scmp.eq.s32.totalorder %s47, 0
      %p236 = por %p234, %p235
      %p237 = scmp.ne.s32.totalorder %s225, %s226
      %p238 = scmp.eq.s32.totalorder %s48, 1
      %p239 = por %p237, %p238
      %p241 = scmp.ne.s32.totalorder %s226, %s240
      %p242 = scmp.eq.s32.totalorder %s48, 0
      %p243 = por %p241, %p242
      %s245 = sadd.s32 %s244, 1
      %p248 = scmp.eq.s32.totalorder %s42, 1
      %p249 = scmp.ne.s32.totalorder %s244, %s246
      %p250 = scmp.eq.s32.totalorder %s42, 0
      %p251 = por %p249, %p250
      %p252 = scmp.ne.s32.totalorder %s244, %s246
      %p253 = scmp.eq.s32.totalorder %s47, 1
      %p254 = por %p252, %p253
      %p255 = scmp.ne.s32.totalorder %s246, %s247
      %p256 = scmp.eq.s32.totalorder %s47, 0
      %p257 = por %p255, %p256
      %p258 = scmp.ne.s32.totalorder %s246, %s247
      %p259 = scmp.eq.s32.totalorder %s48, 1
      %p260 = por %p258, %p259
      %p262 = scmp.ne.s32.totalorder %s247, %s261
      %p263 = scmp.eq.s32.totalorder %s48, 0
      %p264 = por %p262, %p263
      %s266 = sadd.s32 %s265, 1
      %p269 = scmp.eq.s32.totalorder %s42, 1
      %p270 = scmp.ne.s32.totalorder %s265, %s267
      %p271 = scmp.eq.s32.totalorder %s42, 0
      %p272 = por %p270, %p271
      %p273 = scmp.ne.s32.totalorder %s265, %s267
      %p274 = scmp.eq.s32.totalorder %s47, 1
      %p275 = por %p273, %p274
      %p276 = scmp.ne.s32.totalorder %s267, %s268
      %p277 = scmp.eq.s32.totalorder %s47, 0
      %p278 = por %p276, %p277
      %p279 = scmp.ne.s32.totalorder %s267, %s268
      %p280 = scmp.eq.s32.totalorder %s48, 1
      %p281 = por %p279, %p280
      %p283 = scmp.ne.s32.totalorder %s268, %s282
      %p284 = scmp.eq.s32.totalorder %s48, 0
      %p285 = por %p283, %p284
      %s287 = sadd.s32 %s286, 1
      %p290 = scmp.eq.s32.totalorder %s42, 1
      %p291 = scmp.ne.s32.totalorder %s286, %s288
      %p292 = scmp.eq.s32.totalorder %s42, 0
      %p293 = por %p291, %p292
      %p294 = scmp.ne.s32.totalorder %s286, %s288
      %p295 = scmp.eq.s32.totalorder %s47, 1
      %p296 = por %p294, %p295
      %p297 = scmp.ne.s32.totalorder %s288, %s289
      %p298 = scmp.eq.s32.totalorder %s47, 0
      %p299 = por %p297, %p298
      %p300 = scmp.ne.s32.totalorder %s288, %s289
      %p301 = scmp.eq.s32.totalorder %s48, 1
      %p302 = por %p300, %p301
      %p304 = scmp.ne.s32.totalorder %s289, %s303
      %p305 = scmp.eq.s32.totalorder %s48, 0
      %p306 = por %p304, %p305
      %s308 = sadd.s32 %s307, 1
      %p311 = scmp.eq.s32.totalorder %s42, 1
      %p312 = scmp.ne.s32.totalorder %s307, %s309
      %p313 = scmp.eq.s32.totalorder %s42, 0
      %p314 = por %p312, %p313
      %p315 = scmp.ne.s32.totalorder %s307, %s309
      %p316 = scmp.eq.s32.totalorder %s47, 1
      %p317 = por %p315, %p316
      %p318 = scmp.ne.s32.totalorder %s309, %s310
      %p319 = scmp.eq.s32.totalorder %s47, 0
      %p320 = por %p318, %p319
      %p321 = scmp.ne.s32.totalorder %s309, %s310
      %p322 = scmp.eq.s32.totalorder %s48, 1
      %p323 = por %p321, %p322
      %p325 = scmp.ne.s32.totalorder %s310, %s324
      %p326 = scmp.eq.s32.totalorder %s48, 0
      %p327 = por %p325, %p326
      %s329 = sadd.s32 %s328, 1
      %p332 = scmp.eq.s32.totalorder %s42, 1
      %p333 = scmp.ne.s32.totalorder %s328, %s330
      %p334 = scmp.eq.s32.totalorder %s42, 0
      %p335 = por %p333, %p334
      %p336 = scmp.ne.s32.totalorder %s328, %s330
      %p337 = scmp.eq.s32.totalorder %s47, 1
      %p338 = por %p336, %p337
      %p339 = scmp.ne.s32.totalorder %s330, %s331
      %p340 = scmp.eq.s32.totalorder %s47, 0
      %p341 = por %p339, %p340
      %p342 = scmp.ne.s32.totalorder %s330, %s331
      %p343 = scmp.eq.s32.totalorder %s48, 1
      %p344 = por %p342, %p343
      %p346 = scmp.ne.s32.totalorder %s331, %s345
      %p347 = scmp.eq.s32.totalorder %s48, 0
      %p348 = por %p346, %p347
      %s350 = sadd.s32 %s349, 1
      %p353 = scmp.eq.s32.totalorder %s42, 1
      %p354 = scmp.ne.s32.totalorder %s349, %s351
      %p355 = scmp.eq.s32.totalorder %s42, 0
      %p356 = por %p354, %p355
      %p357 = scmp.ne.s32.totalorder %s349, %s351
      %p358 = scmp.eq.s32.totalorder %s47, 1
      %p359 = por %p357, %p358
      %p360 = scmp.ne.s32.totalorder %s351, %s352
      %p361 = scmp.eq.s32.totalorder %s47, 0
      %p362 = por %p360, %p361
      %p363 = scmp.ne.s32.totalorder %s351, %s352
      %p364 = scmp.eq.s32.totalorder %s48, 1
      %p365 = por %p363, %p364
      %p367 = scmp.ne.s32.totalorder %s352, %s366
      %p368 = scmp.eq.s32.totalorder %s48, 0
      %p369 = por %p367, %p368
      %s371 = sadd.s32 %s370, 1
      %p374 = scmp.eq.s32.totalorder %s42, 1
      %p375 = scmp.ne.s32.totalorder %s370, %s372
      %p376 = scmp.eq.s32.totalorder %s42, 0
      %p377 = por %p375, %p376
      %p378 = scmp.ne.s32.totalorder %s370, %s372
      %p379 = scmp.eq.s32.totalorder %s47, 1
      %p380 = por %p378, %p379
      %p381 = scmp.ne.s32.totalorder %s372, %s373
      %p382 = scmp.eq.s32.totalorder %s47, 0
      %p383 = por %p381, %p382
      %p384 = scmp.ne.s32.totalorder %s372, %s373
      %p385 = scmp.eq.s32.totalorder %s48, 1
      %p386 = por %p384, %p385
      %p388 = scmp.ne.s32.totalorder %s373, %s387
      %p389 = scmp.eq.s32.totalorder %s48, 0
      %p390 = por %p388, %p389
      %s392 = sadd.s32 %s391, 1
      %p395 = scmp.eq.s32.totalorder %s42, 1
      %p396 = scmp.ne.s32.totalorder %s391, %s393
      %p397 = scmp.eq.s32.totalorder %s42, 0
      %p398 = por %p396, %p397
      %p399 = scmp.ne.s32.totalorder %s391, %s393
      %p400 = scmp.eq.s32.totalorder %s47, 1
      %p401 = por %p399, %p400
      %p402 = scmp.ne.s32.totalorder %s393, %s394
      %p403 = scmp.eq.s32.totalorder %s47, 0
      %p404 = por %p402, %p403
      %p405 = scmp.ne.s32.totalorder %s393, %s394
      %p406 = scmp.eq.s32.totalorder %s48, 1
      %p407 = por %p405, %p406
      %p409 = scmp.ne.s32.totalorder %s394, %s408
      %p410 = scmp.eq.s32.totalorder %s48, 0
      %p411 = por %p409, %p410
      %s413 = sadd.s32 %s412, 1
      %p416 = scmp.eq.s32.totalorder %s42, 1
      %p417 = scmp.ne.s32.totalorder %s412, %s414
      %p418 = scmp.eq.s32.totalorder %s42, 0
      %p419 = por %p417, %p418
      %p420 = scmp.ne.s32.totalorder %s412, %s414
      %p421 = scmp.eq.s32.totalorder %s47, 1
      %p422 = por %p420, %p421
      %p423 = scmp.ne.s32.totalorder %s414, %s415
      %p424 = scmp.eq.s32.totalorder %s47, 0
      %p425 = por %p423, %p424
      %p426 = scmp.ne.s32.totalorder %s414, %s415
      %p427 = scmp.eq.s32.totalorder %s48, 1
      %p428 = por %p426, %p427
      %p430 = scmp.ne.s32.totalorder %s415, %s429
      %p431 = scmp.eq.s32.totalorder %s48, 0
      %p432 = por %p430, %p431
      %s434 = sadd.s32 %s433, 1
      %p437 = scmp.eq.s32.totalorder %s42, 1
      %p438 = scmp.ne.s32.totalorder %s433, %s435
      %p439 = scmp.eq.s32.totalorder %s42, 0
      %p440 = por %p438, %p439
      %p441 = scmp.ne.s32.totalorder %s433, %s435
      %p442 = scmp.eq.s32.totalorder %s47, 1
      %p443 = por %p441, %p442
      %p444 = scmp.ne.s32.totalorder %s435, %s436
      %p445 = scmp.eq.s32.totalorder %s47, 0
      %p446 = por %p444, %p445
      %p447 = scmp.ne.s32.totalorder %s435, %s436
      %p448 = scmp.eq.s32.totalorder %s48, 1
      %p449 = por %p447, %p448
      %p451 = scmp.ne.s32.totalorder %s436, %s450
      %p452 = scmp.eq.s32.totalorder %s48, 0
      %p453 = por %p451, %p452
      %s455 = sadd.s32 %s454, 1
      %p458 = scmp.eq.s32.totalorder %s42, 1
      %p459 = scmp.ne.s32.totalorder %s454, %s456
      %p460 = scmp.eq.s32.totalorder %s42, 0
      %p461 = por %p459, %p460
      %p462 = scmp.ne.s32.totalorder %s454, %s456
      %p463 = scmp.eq.s32.totalorder %s47, 1
      %p464 = por %p462, %p463
      %p465 = scmp.ne.s32.totalorder %s456, %s457
      %p466 = scmp.eq.s32.totalorder %s47, 0
      %p467 = por %p465, %p466
      %p468 = scmp.ne.s32.totalorder %s456, %s457
      %p469 = scmp.eq.s32.totalorder %s48, 1
      %p470 = por %p468, %p469
      %p472 = scmp.ne.s32.totalorder %s457, %s471
      %p473 = scmp.eq.s32.totalorder %s48, 0
      %p474 = por %p472, %p473
      %s476 = sadd.s32 %s475, 1
      %p479 = scmp.eq.s32.totalorder %s42, 1
      %p480 = scmp.ne.s32.totalorder %s475, %s477
      %p481 = scmp.eq.s32.totalorder %s42, 0
      %p482 = por %p480, %p481
      %p483 = scmp.ne.s32.totalorder %s475, %s477
      %p484 = scmp.eq.s32.totalorder %s47, 1
      %p485 = por %p483, %p484
      %p486 = scmp.ne.s32.totalorder %s477, %s478
      %p487 = scmp.eq.s32.totalorder %s47, 0
      %p488 = por %p486, %p487
      %p489 = scmp.ne.s32.totalorder %s477, %s478
      %p490 = scmp.eq.s32.totalorder %s48, 1
      %p491 = por %p489, %p490
      %p493 = scmp.ne.s32.totalorder %s478, %s492
      %p494 = scmp.eq.s32.totalorder %s48, 0
      %p495 = por %p493, %p494
      %s497 = sadd.s32 %s496, 1
      %p500 = scmp.eq.s32.totalorder %s42, 1
      %p501 = scmp.ne.s32.totalorder %s496, %s498
      %p502 = scmp.eq.s32.totalorder %s42, 0
      %p503 = por %p501, %p502
      %p504 = scmp.ne.s32.totalorder %s496, %s498
      %p505 = scmp.eq.s32.totalorder %s47, 1
      %p506 = por %p504, %p505
      %p507 = scmp.ne.s32.totalorder %s498, %s499
      %p508 = scmp.eq.s32.totalorder %s47, 0
      %p509 = por %p507, %p508
      %p510 = scmp.ne.s32.totalorder %s498, %s499
      %p511 = scmp.eq.s32.totalorder %s48, 1
      %p512 = por %p510, %p511
      %p514 = scmp.ne.s32.totalorder %s499, %s513
      %p515 = scmp.eq.s32.totalorder %s48, 0
      %p516 = por %p514, %p515
      %s518 = sadd.s32 %s517, 1
      %p521 = scmp.eq.s32.totalorder %s42, 1
      %p522 = scmp.ne.s32.totalorder %s517, %s519
      %p523 = scmp.eq.s32.totalorder %s42, 0
      %p524 = por %p522, %p523
      %p525 = scmp.ne.s32.totalorder %s517, %s519
      %p526 = scmp.eq.s32.totalorder %s47, 1
      %p527 = por %p525, %p526
      %p528 = scmp.ne.s32.totalorder %s519, %s520
      %p529 = scmp.eq.s32.totalorder %s47, 0
      %p530 = por %p528, %p529
      %p531 = scmp.ne.s32.totalorder %s519, %s520
      %p532 = scmp.eq.s32.totalorder %s48, 1
      %p533 = por %p531, %p532
      %p535 = scmp.ne.s32.totalorder %s520, %s534
      %p536 = scmp.eq.s32.totalorder %s48, 0
      %p537 = por %p535, %p536
      %s539 = sadd.s32 %s538, 1
      %p542 = scmp.eq.s32.totalorder %s42, 1
      %p543 = scmp.ne.s32.totalorder %s538, %s540
      %p544 = scmp.eq.s32.totalorder %s42, 0
      %p545 = por %p543, %p544
      %p546 = scmp.ne.s32.totalorder %s538, %s540
      %p547 = scmp.eq.s32.totalorder %s47, 1
      %p548 = por %p546, %p547
      %p549 = scmp.ne.s32.totalorder %s540, %s541
      %p550 = scmp.eq.s32.totalorder %s47, 0
      %p551 = por %p549, %p550
      %p552 = scmp.ne.s32.totalorder %s540, %s541
      %p553 = scmp.eq.s32.totalorder %s48, 1
      %p554 = por %p552, %p553
      %p556 = scmp.ne.s32.totalorder %s541, %s555
      %p557 = scmp.eq.s32.totalorder %s48, 0
      %p558 = por %p556, %p557
      %s560 = sadd.s32 %s559, 1
      %p563 = scmp.eq.s32.totalorder %s42, 1
      %p564 = scmp.ne.s32.totalorder %s559, %s561
      %p565 = scmp.eq.s32.totalorder %s42, 0
      %p566 = por %p564, %p565
      %p567 = scmp.ne.s32.totalorder %s559, %s561
      %p568 = scmp.eq.s32.totalorder %s47, 1
      %p569 = por %p567, %p568
      %p570 = scmp.ne.s32.totalorder %s561, %s562
      %p571 = scmp.eq.s32.totalorder %s47, 0
      %p572 = por %p570, %p571
      %p573 = scmp.ne.s32.totalorder %s561, %s562
      %p574 = scmp.eq.s32.totalorder %s48, 1
      %p575 = por %p573, %p574
      %p577 = scmp.ne.s32.totalorder %s562, %s576
      %p578 = scmp.eq.s32.totalorder %s48, 0
      %p579 = por %p577, %p578
      %s580 = ssub.s32 %s42, %s49
      %p581 = scmp.eq.s32.totalorder %s580, 0
      %s583 = sadd.s32 %s582, 1
      %s584 = scalar_select %p581, %s582, %s583
      %p587 = pneg %p581
      %p588 = scmp.eq.s32.totalorder %s42, 1
      %p589 = por %p587, %p588
      %p590 = scmp.ne.s32.totalorder %s582, %s585
      %p591 = scmp.eq.s32.totalorder %s42, 0
      %p592 = por %p590, %p591
      %p593 = scmp.ne.s32.totalorder %s582, %s585
      %p594 = scmp.eq.s32.totalorder %s47, 1
      %p595 = por %p593, %p594
      %p596 = scmp.ne.s32.totalorder %s585, %s586
      %p597 = scmp.eq.s32.totalorder %s47, 0
      %p598 = por %p596, %p597
      %p599 = scmp.ne.s32.totalorder %s585, %s586
      %p600 = scmp.eq.s32.totalorder %s48, 1
      %p601 = por %p599, %p600
      %p603 = scmp.ne.s32.totalorder %s586, %s602
      %p604 = scmp.eq.s32.totalorder %s48, 0
      %p605 = por %p603, %p604
      %p606 = scmp.le.s32.totalorder 1, %s42
      %p607 = scmp.lt.s32.totalorder %s42, 3
      %p608 = pnand %p606, %p607
      %p609 = pneg %p608
      // Predicated region
      $region9: #{tpu_custom_call.1} parent=5 // pred_check
        _
      $region10: #{tpu_custom_call.1} parent=5 // pred_check_branch
        %611 = sbr.rel (%p608) target = $region12
      $region11: #{tpu_custom_call.1} parent=5 // pred_region
        %s612 = ssub.s32 %s42, 1
        // Predicated region
        $region13: #{tpu_custom_call.1} parent=11 // pred_check
          %p613 = pneg %p89
        $region14: #{tpu_custom_call.1} parent=11 // pred_check_branch
          %615 = sbr.rel (%p613) target = $region16
        $region15: #{tpu_custom_call.1} parent=11 // pred_region
          %617 = vsyncadd [#allocation4], 0
          %s619 = sshll.u32 %s1, 4
          %s620 = int_to_ptr.hbm [resolvable:$true] %s619
          %s621 = sshll.u32 [#allocation3], 4
          %s622 = int_to_ptr.vmem [resolvable:$true] %s621
          %624 = dma.hbm_to_vmem [thread:$0]  %s620, 16, %s622, [#allocation4]
        $region16: #{tpu_custom_call.1} parent=11 // pred_fallthru
          _
        // Predicated region
        $region17: #{tpu_custom_call.1} parent=11 // pred_check
          %p625 = pneg %p110
        $region18: #{tpu_custom_call.1} parent=11 // pred_check_branch
          %627 = sbr.rel (%p625) target = $region20
        $region19: #{tpu_custom_call.1} parent=11 // pred_region
          _
        $region20: #{tpu_custom_call.1} parent=11 // pred_fallthru
          _
        // Predicated region
        $region21: #{tpu_custom_call.1} parent=11 // pred_check
          %p628 = pneg %p131
        $region22: #{tpu_custom_call.1} parent=11 // pred_check_branch
          %630 = sbr.rel (%p628) target = $region24
        $region23: #{tpu_custom_call.1} parent=11 // pred_region
          %632 = vsyncadd [#allocation7], 0
          %s634 = sshll.u32 %s3, 4
          %s635 = int_to_ptr.hbm [resolvable:$true] %s634
          %s636 = sshll.u32 [#allocation6], 4
          %s637 = int_to_ptr.vmem [resolvable:$true] %s636
          %639 = dma.hbm_to_vmem [thread:$0]  %s635, 16, %s637, [#allocation7]
        $region24: #{tpu_custom_call.1} parent=11 // pred_fallthru
          _
        // Predicated region
        $region25: #{tpu_custom_call.1} parent=11 // pred_check
          %p640 = pneg %p152
        $region26: #{tpu_custom_call.1} parent=11 // pred_check_branch
          %642 = sbr.rel (%p640) target = $region28
        $region27: #{tpu_custom_call.1} parent=11 // pred_region
          _
        $region28: #{tpu_custom_call.1} parent=11 // pred_fallthru
          _
        // Predicated region
        $region29: #{tpu_custom_call.1} parent=11 // pred_check
          %p643 = pneg %p173
        $region30: #{tpu_custom_call.1} parent=11 // pred_check_branch
          %645 = sbr.rel (%p643) target = $region32
        $region31: #{tpu_custom_call.1} parent=11 // pred_region
          _
        $region32: #{tpu_custom_call.1} parent=11 // pred_fallthru
          _
        // Predicated region
        $region33: #{tpu_custom_call.1} parent=11 // pred_check
          %p646 = pneg %p194
        $region34: #{tpu_custom_call.1} parent=11 // pred_check_branch
          %648 = sbr.rel (%p646) target = $region36
        $region35: #{tpu_custom_call.1} parent=11 // pred_region
          _
        $region36: #{tpu_custom_call.1} parent=11 // pred_fallthru
          _
        // Predicated region
        $region37: #{tpu_custom_call.1} parent=11 // pred_check
          %p649 = pneg %p215
        $region38: #{tpu_custom_call.1} parent=11 // pred_check_branch
          %651 = sbr.rel (%p649) target = $region40
        $region39: #{tpu_custom_call.1} parent=11 // pred_region
          _
        $region40: #{tpu_custom_call.1} parent=11 // pred_fallthru
          _
        // Predicated region
        $region41: #{tpu_custom_call.1} parent=11 // pred_check
          %p652 = pneg %p236
        $region42: #{tpu_custom_call.1} parent=11 // pred_check_branch
          %654 = sbr.rel (%p652) target = $region44
        $region43: #{tpu_custom_call.1} parent=11 // pred_region
          %656 = vsyncadd [#allocation7], 0
          %s658 = sshll.u32 %s8, 4
          %s659 = int_to_ptr.hbm [resolvable:$true] %s658
          %s660 = sshll.u32 [#allocation8], 4
          %s661 = int_to_ptr.vmem [resolvable:$true] %s660
          %663 = dma.hbm_to_vmem [thread:$0]  %s659, 16, %s661, [#allocation7]
        $region44: #{tpu_custom_call.1} parent=11 // pred_fallthru
          _
        // Predicated region
        $region45: #{tpu_custom_call.1} parent=11 // pred_check
          %p664 = pneg %p257
        $region46: #{tpu_custom_call.1} parent=11 // pred_check_branch
          %666 = sbr.rel (%p664) target = $region48
        $region47: #{tpu_custom_call.1} parent=11 // pred_region
          _
        $region48: #{tpu_custom_call.1} parent=11 // pred_fallthru
          _
        // Predicated region
        $region49: #{tpu_custom_call.1} parent=11 // pred_check
          %p667 = pneg %p278
        $region50: #{tpu_custom_call.1} parent=11 // pred_check_branch
          %669 = sbr.rel (%p667) target = $region52
        $region51: #{tpu_custom_call.1} parent=11 // pred_region
          %671 = vsyncadd [#allocation10], 0
          %s673 = sshll.u32 %s10, 4
          %s674 = int_to_ptr.hbm [resolvable:$true] %s673
          %s675 = sshll.u32 [#allocation9], 4
          %s676 = int_to_ptr.vmem [resolvable:$true] %s675
          %678 = dma.hbm_to_vmem [thread:$0]  %s674, 16, %s676, [#allocation10]
        $region52: #{tpu_custom_call.1} parent=11 // pred_fallthru
          _
        // Predicated region
        $region53: #{tpu_custom_call.1} parent=11 // pred_check
          %p679 = pneg %p299
        $region54: #{tpu_custom_call.1} parent=11 // pred_check_branch
          %681 = sbr.rel (%p679) target = $region56
        $region55: #{tpu_custom_call.1} parent=11 // pred_region
          %683 = vsyncadd [#allocation10], 0
          %s685 = sshll.u32 %s11, 4
          %s686 = int_to_ptr.hbm [resolvable:$true] %s685
          %s687 = sshll.u32 [#allocation11], 4
          %s688 = int_to_ptr.vmem [resolvable:$true] %s687
          %690 = dma.hbm_to_vmem [thread:$0]  %s686, 16, %s688, [#allocation10]
        $region56: #{tpu_custom_call.1} parent=11 // pred_fallthru
          _
        // Predicated region
        $region57: #{tpu_custom_call.1} parent=11 // pred_check
          %p691 = pneg %p320
        $region58: #{tpu_custom_call.1} parent=11 // pred_check_branch
          %693 = sbr.rel (%p691) target = $region60
        $region59: #{tpu_custom_call.1} parent=11 // pred_region
          %695 = vsyncadd [#allocation13], 0
          %s697 = sshll.u32 %s12, 4
          %s698 = int_to_ptr.hbm [resolvable:$true] %s697
          %s699 = sshll.u32 [#allocation12], 4
          %s700 = int_to_ptr.vmem [resolvable:$true] %s699
          %702 = dma.hbm_to_vmem [thread:$0]  %s698, 16, %s700, [#allocation13]
        $region60: #{tpu_custom_call.1} parent=11 // pred_fallthru
          _
        // Predicated region
        $region61: #{tpu_custom_call.1} parent=11 // pred_check
          %p703 = pneg %p341
        $region62: #{tpu_custom_call.1} parent=11 // pred_check_branch
          %705 = sbr.rel (%p703) target = $region64
        $region63: #{tpu_custom_call.1} parent=11 // pred_region
          _
        $region64: #{tpu_custom_call.1} parent=11 // pred_fallthru
          _
        // Predicated region
        $region65: #{tpu_custom_call.1} parent=11 // pred_check
          %p706 = pneg %p362
        $region66: #{tpu_custom_call.1} parent=11 // pred_check_branch
          %708 = sbr.rel (%p706) target = $region68
        $region67: #{tpu_custom_call.1} parent=11 // pred_region
          %710 = vsyncadd [#allocation13], 0
          %s712 = sshll.u32 %s14, 4
          %s713 = int_to_ptr.hbm [resolvable:$true] %s712
          %s714 = sshll.u32 [#allocation14], 4
          %s715 = int_to_ptr.vmem [resolvable:$true] %s714
          %717 = dma.hbm_to_vmem [thread:$0]  %s713, 16, %s715, [#allocation13]
        $region68: #{tpu_custom_call.1} parent=11 // pred_fallthru
          _
        // Predicated region
        $region69: #{tpu_custom_call.1} parent=11 // pred_check
          %p718 = pneg %p383
        $region70: #{tpu_custom_call.1} parent=11 // pred_check_branch
          %720 = sbr.rel (%p718) target = $region72
        $region71: #{tpu_custom_call.1} parent=11 // pred_region
          %722 = vsyncadd [#allocation16], 0
          %s724 = sshll.u32 %s15, 4
          %s725 = int_to_ptr.hbm [resolvable:$true] %s724
          %s726 = sshll.u32 [#allocation15], 4
          %s727 = int_to_ptr.vmem [resolvable:$true] %s726
          %729 = dma.hbm_to_vmem [thread:$0]  %s725, 16, %s727, [#allocation16]
        $region72: #{tpu_custom_call.1} parent=11 // pred_fallthru
          _
        // Predicated region
        $region73: #{tpu_custom_call.1} parent=11 // pred_check
          %p730 = pneg %p404
        $region74: #{tpu_custom_call.1} parent=11 // pred_check_branch
          %732 = sbr.rel (%p730) target = $region76
        $region75: #{tpu_custom_call.1} parent=11 // pred_region
          %734 = vsyncadd [#allocation16], 0
          %s736 = sshll.u32 %s16, 4
          %s737 = int_to_ptr.hbm [resolvable:$true] %s736
          %s738 = sshll.u32 [#allocation17], 4
          %s739 = int_to_ptr.vmem [resolvable:$true] %s738
          %741 = dma.hbm_to_vmem [thread:$0]  %s737, 16, %s739, [#allocation16]
        $region76: #{tpu_custom_call.1} parent=11 // pred_fallthru
          _
        // Predicated region
        $region77: #{tpu_custom_call.1} parent=11 // pred_check
          %p742 = pneg %p425
        $region78: #{tpu_custom_call.1} parent=11 // pred_check_branch
          %744 = sbr.rel (%p742) target = $region80
        $region79: #{tpu_custom_call.1} parent=11 // pred_region
          %746 = vsyncadd [#allocation19], 0
          %s747 = sshll.u32 %s17, 4
          %s748 = int_to_ptr.hbm [resolvable:$true] %s747
          %s749 = sshll.u32 [#allocation18], 4
          %s750 = int_to_ptr.vmem [resolvable:$true] %s749
          %755 = dma.hbm_to_vmem [thread:$0]  %s748, 256, %s750, [#allocation19], 64, 64, 4
        $region80: #{tpu_custom_call.1} parent=11 // pred_fallthru
          _
        // Predicated region
        $region81: #{tpu_custom_call.1} parent=11 // pred_check
          %p756 = pneg %p446
        $region82: #{tpu_custom_call.1} parent=11 // pred_check_branch
          %758 = sbr.rel (%p756) target = $region84
        $region83: #{tpu_custom_call.1} parent=11 // pred_region
          %760 = vsyncadd [#allocation19], 0
          %s762 = sshll.u32 %s18, 4
          %s763 = int_to_ptr.hbm [resolvable:$true] %s762
          %s764 = sshll.u32 [#allocation20], 4
          %s765 = int_to_ptr.vmem [resolvable:$true] %s764
          %767 = dma.hbm_to_vmem [thread:$0]  %s763, 16, %s765, [#allocation19]
        $region84: #{tpu_custom_call.1} parent=11 // pred_fallthru
          _
        // Predicated region
        $region85: #{tpu_custom_call.1} parent=11 // pred_check
          %p768 = pneg %p467
        $region86: #{tpu_custom_call.1} parent=11 // pred_check_branch
          %770 = sbr.rel (%p768) target = $region88
        $region87: #{tpu_custom_call.1} parent=11 // pred_region
          %772 = vsyncadd [#allocation22], 0
          %s773 = sshll.u32 %s19, 4
          %s774 = int_to_ptr.hbm [resolvable:$true] %s773
          %s775 = sshll.u32 [#allocation21], 4
          %s776 = int_to_ptr.vmem [resolvable:$true] %s775
          %781 = dma.hbm_to_vmem [thread:$0]  %s774, 256, %s776, [#allocation22], 64, 64, 4
        $region88: #{tpu_custom_call.1} parent=11 // pred_fallthru
          _
        // Predicated region
        $region89: #{tpu_custom_call.1} parent=11 // pred_check
          %p782 = pneg %p488
        $region90: #{tpu_custom_call.1} parent=11 // pred_check_branch
          %784 = sbr.rel (%p782) target = $region92
        $region91: #{tpu_custom_call.1} parent=11 // pred_region
          %786 = vsyncadd [#allocation22], 0
          %s788 = sshll.u32 %s20, 4
          %s789 = int_to_ptr.hbm [resolvable:$true] %s788
          %s790 = sshll.u32 [#allocation23], 4
          %s791 = int_to_ptr.vmem [resolvable:$true] %s790
          %793 = dma.hbm_to_vmem [thread:$0]  %s789, 16, %s791, [#allocation22]
        $region92: #{tpu_custom_call.1} parent=11 // pred_fallthru
          _
        // Predicated region
        $region93: #{tpu_custom_call.1} parent=11 // pred_check
          %p794 = pneg %p509
        $region94: #{tpu_custom_call.1} parent=11 // pred_check_branch
          %796 = sbr.rel (%p794) target = $region96
        $region95: #{tpu_custom_call.1} parent=11 // pred_region
          _
        $region96: #{tpu_custom_call.1} parent=11 // pred_fallthru
          _
        // Predicated region
        $region97: #{tpu_custom_call.1} parent=11 // pred_check
          %p797 = pneg %p530
        $region98: #{tpu_custom_call.1} parent=11 // pred_check_branch
          %799 = sbr.rel (%p797) target = $region100
        $region99: #{tpu_custom_call.1} parent=11 // pred_region
          _
        $region100: #{tpu_custom_call.1} parent=11 // pred_fallthru
          _
        // Predicated region
        $region101: #{tpu_custom_call.1} parent=11 // pred_check
          %p800 = pneg %p551
        $region102: #{tpu_custom_call.1} parent=11 // pred_check_branch
          %802 = sbr.rel (%p800) target = $region104
        $region103: #{tpu_custom_call.1} parent=11 // pred_region
          %804 = vsyncadd [#allocation25], 0
          %s805 = sshll.u32 %s23, 4
          %s806 = int_to_ptr.hbm [resolvable:$true] %s805
          %s807 = sshll.u32 [#allocation24], 4
          %s808 = int_to_ptr.vmem [resolvable:$true] %s807
          %813 = dma.hbm_to_vmem [thread:$0]  %s806, 256, %s808, [#allocation25], 64, 64, 4
        $region104: #{tpu_custom_call.1} parent=11 // pred_fallthru
          _
        // Predicated region
        $region105: #{tpu_custom_call.1} parent=11 // pred_check
          %p814 = pneg %p572
        $region106: #{tpu_custom_call.1} parent=11 // pred_check_branch
          %816 = sbr.rel (%p814) target = $region108
        $region107: #{tpu_custom_call.1} parent=11 // pred_region
          _
        $region108: #{tpu_custom_call.1} parent=11 // pred_fallthru
          _
      $region12: #{tpu_custom_call.1} parent=5 // pred_fallthru
        _
      %p817 = scmp.lt.s32.totalorder %s42, 2
      // Predicated region
      $region109: #{tpu_custom_call.1} parent=5 // pred_check
        %p818 = pneg %p817
      $region110: #{tpu_custom_call.1} parent=5 // pred_check_branch
        %820 = sbr.rel (%p818) target = $region112
      $region111: #{tpu_custom_call.1} parent=5 // pred_region
        // Predicated region
        $region113: #{tpu_custom_call.1} parent=111 // pred_check
          %p821 = pneg %p62
        $region114: #{tpu_custom_call.1} parent=111 // pred_check_branch
          %823 = sbr.rel (%p821) target = $region116
        $region115: #{tpu_custom_call.1} parent=111 // pred_region
          %p824 = scmp.lt.s32.totalorder %s42, 1
          %s825 = scalar_select %p824, %s42, 1
          %s826 = smul.addr %s825, 2
          %s827 = smul.addr %s826, 4
          %s828 = scalar_lea.vmem %s0, %s827
        $region116: #{tpu_custom_call.1} parent=111 // pred_fallthru
          _
      $region112: #{tpu_custom_call.1} parent=5 // pred_fallthru
        _
      %p829 = scmp.le.s32.totalorder 1, %s42
      %p830 = scmp.lt.s32.totalorder %s42, 3
      %p831 = pnand %p829, %p830
      %p832 = pneg %p831
      // Predicated region
      $region117: #{tpu_custom_call.1} parent=5 // pred_check
        _
      $region118: #{tpu_custom_call.1} parent=5 // pred_check_branch
        %834 = sbr.rel (%p831) target = $region120
      $region119: #{tpu_custom_call.1} parent=5 // pred_region
        %s835 = ssub.s32 %s42, 1
        // Predicated region
        $region121: #{tpu_custom_call.1} parent=119 // pred_check
          %p836 = pneg %p89
        $region122: #{tpu_custom_call.1} parent=119 // pred_check_branch
          %838 = sbr.rel (%p836) target = $region124
        $region123: #{tpu_custom_call.1} parent=119 // pred_region
          %840 = dma.done [#allocation4], 16
        $region124: #{tpu_custom_call.1} parent=119 // pred_fallthru
          _
        // Predicated region
        $region125: #{tpu_custom_call.1} parent=119 // pred_check
          %p841 = pneg %p131
        $region126: #{tpu_custom_call.1} parent=119 // pred_check_branch
          %843 = sbr.rel (%p841) target = $region128
        $region127: #{tpu_custom_call.1} parent=119 // pred_region
          %845 = dma.done [#allocation7], 16
        $region128: #{tpu_custom_call.1} parent=119 // pred_fallthru
          _
        // Predicated region
        $region129: #{tpu_custom_call.1} parent=119 // pred_check
          %p846 = pneg %p236
        $region130: #{tpu_custom_call.1} parent=119 // pred_check_branch
          %848 = sbr.rel (%p846) target = $region132
        $region131: #{tpu_custom_call.1} parent=119 // pred_region
          %850 = dma.done [#allocation7], 16
        $region132: #{tpu_custom_call.1} parent=119 // pred_fallthru
          _
        // Predicated region
        $region133: #{tpu_custom_call.1} parent=119 // pred_check
          %p851 = pneg %p278
        $region134: #{tpu_custom_call.1} parent=119 // pred_check_branch
          %853 = sbr.rel (%p851) target = $region136
        $region135: #{tpu_custom_call.1} parent=119 // pred_region
          %855 = dma.done [#allocation10], 16
        $region136: #{tpu_custom_call.1} parent=119 // pred_fallthru
          _
        // Predicated region
        $region137: #{tpu_custom_call.1} parent=119 // pred_check
          %p856 = pneg %p299
        $region138: #{tpu_custom_call.1} parent=119 // pred_check_branch
          %858 = sbr.rel (%p856) target = $region140
        $region139: #{tpu_custom_call.1} parent=119 // pred_region
          %860 = dma.done [#allocation10], 16
        $region140: #{tpu_custom_call.1} parent=119 // pred_fallthru
          _
        // Predicated region
        $region141: #{tpu_custom_call.1} parent=119 // pred_check
          %p861 = pneg %p320
        $region142: #{tpu_custom_call.1} parent=119 // pred_check_branch
          %863 = sbr.rel (%p861) target = $region144
        $region143: #{tpu_custom_call.1} parent=119 // pred_region
          %865 = dma.done [#allocation13], 16
        $region144: #{tpu_custom_call.1} parent=119 // pred_fallthru
          _
        // Predicated region
        $region145: #{tpu_custom_call.1} parent=119 // pred_check
          %p866 = pneg %p362
        $region146: #{tpu_custom_call.1} parent=119 // pred_check_branch
          %868 = sbr.rel (%p866) target = $region148
        $region147: #{tpu_custom_call.1} parent=119 // pred_region
          %870 = dma.done [#allocation13], 16
        $region148: #{tpu_custom_call.1} parent=119 // pred_fallthru
          _
        // Predicated region
        $region149: #{tpu_custom_call.1} parent=119 // pred_check
          %p871 = pneg %p383
        $region150: #{tpu_custom_call.1} parent=119 // pred_check_branch
          %873 = sbr.rel (%p871) target = $region152
        $region151: #{tpu_custom_call.1} parent=119 // pred_region
          %875 = dma.done [#allocation16], 16
        $region152: #{tpu_custom_call.1} parent=119 // pred_fallthru
          _
        // Predicated region
        $region153: #{tpu_custom_call.1} parent=119 // pred_check
          %p876 = pneg %p404
        $region154: #{tpu_custom_call.1} parent=119 // pred_check_branch
          %878 = sbr.rel (%p876) target = $region156
        $region155: #{tpu_custom_call.1} parent=119 // pred_region
          %880 = dma.done [#allocation16], 16
        $region156: #{tpu_custom_call.1} parent=119 // pred_fallthru
          _
        // Predicated region
        $region157: #{tpu_custom_call.1} parent=119 // pred_check
          %p881 = pneg %p425
        $region158: #{tpu_custom_call.1} parent=119 // pred_check_branch
          %883 = sbr.rel (%p881) target = $region160
        $region159: #{tpu_custom_call.1} parent=119 // pred_region
          %885 = dma.done [#allocation19], 256
        $region160: #{tpu_custom_call.1} parent=119 // pred_fallthru
          _
        // Predicated region
        $region161: #{tpu_custom_call.1} parent=119 // pred_check
          %p886 = pneg %p446
        $region162: #{tpu_custom_call.1} parent=119 // pred_check_branch
          %888 = sbr.rel (%p886) target = $region164
        $region163: #{tpu_custom_call.1} parent=119 // pred_region
          %890 = dma.done [#allocation19], 16
        $region164: #{tpu_custom_call.1} parent=119 // pred_fallthru
          _
        // Predicated region
        $region165: #{tpu_custom_call.1} parent=119 // pred_check
          %p891 = pneg %p467
        $region166: #{tpu_custom_call.1} parent=119 // pred_check_branch
          %893 = sbr.rel (%p891) target = $region168
        $region167: #{tpu_custom_call.1} parent=119 // pred_region
          %895 = dma.done [#allocation22], 256
        $region168: #{tpu_custom_call.1} parent=119 // pred_fallthru
          _
        // Predicated region
        $region169: #{tpu_custom_call.1} parent=119 // pred_check
          %p896 = pneg %p488
        $region170: #{tpu_custom_call.1} parent=119 // pred_check_branch
          %898 = sbr.rel (%p896) target = $region172
        $region171: #{tpu_custom_call.1} parent=119 // pred_region
          %900 = dma.done [#allocation22], 16
        $region172: #{tpu_custom_call.1} parent=119 // pred_fallthru
          _
        // Predicated region
        $region173: #{tpu_custom_call.1} parent=119 // pred_check
          %p901 = pneg %p551
        $region174: #{tpu_custom_call.1} parent=119 // pred_check_branch
          %903 = sbr.rel (%p901) target = $region176
        $region175: #{tpu_custom_call.1} parent=119 // pred_region
          %905 = dma.done [#allocation25], 256
        $region176: #{tpu_custom_call.1} parent=119 // pred_fallthru
          _
        %p906 = scmp.lt.s32.totalorder %s47, 1
        %s907 = scalar_select %p906, %s47, 1
        %s908 = smul.addr %s907, 2
        %s909 = smul.addr %s908, 4
        %s910 = scalar_lea.vmem %s0, %s909
        %p911 = pneg %p68
        %p912 = pneg %p65
        %p913 = pneg %p89
        %p914 = pneg %p86
        %p915 = pneg %p110
        %p916 = pneg %p107
        %p917 = pneg %p131
        %p918 = pneg %p128
        %p919 = pneg %p152
        %p920 = pneg %p149
        %p921 = pneg %p173
        %p922 = pneg %p170
        %p923 = pneg %p194
        %p924 = pneg %p191
        %p925 = pneg %p215
        %p926 = pneg %p212
        %p927 = pneg %p236
        %p928 = pneg %p233
        %p929 = pneg %p257
        %p930 = pneg %p254
        %p931 = pneg %p278
        %p932 = pneg %p275
        %p933 = pneg %p299
        %p934 = pneg %p296
        %p935 = pneg %p320
        %p936 = pneg %p317
        %p937 = pneg %p341
        %p938 = pneg %p338
        %p939 = pneg %p362
        %p940 = pneg %p359
        %p941 = pneg %p383
        %p942 = pneg %p380
        %p943 = pneg %p404
        %p944 = pneg %p401
        %p945 = pneg %p425
        %p946 = pneg %p422
        %p947 = pneg %p446
        %p948 = pneg %p443
        %p949 = pneg %p467
        %p950 = pneg %p464
        %p951 = pneg %p488
        %p952 = pneg %p485
        %p953 = pneg %p509
        %p954 = pneg %p506
        %p955 = pneg %p530
        %p956 = pneg %p527
        %p957 = pneg %p551
        %p958 = pneg %p548
        %p959 = pneg %p572
        %p960 = pneg %p569
        %p961 = pneg %p598
        %p962 = pneg %p595
        %s963 = sand.u32 %s585, 1
        %s964 = scalar_lea.sflag [#allocation5], %s963
        %s965 = sand.u32 %s585, 1
        %s966 = smul.addr %s965, 2
        %s967 = scalar_lea.vmem [#allocation26], %s966
        %p968 = scmp.lt.s32.totalorder %s47, 1
        %s969 = scalar_select %p968, %s47, 1
        %s970 = smul.addr %s969, 2
        %s971 = smul.addr %s970, 4
        %s972 = scalar_lea.vmem %s0, %s971
        %v974 = vld [vmem:[%s972] sm:$0xf]
        %v975 = vld [vmem:[%s972 + $0x4] sm:$0xf]
        %v976 = vld [vmem:[#allocation3] sm:$0x1]
        %v977 = vld [vmem:[%s2] sm:$0x3]
        %979 = vset.pattern.permute.xlu0 0
        %980 = vperm.xlu0 %979, %v977
        %v981 = vpop.permute.xlu0 %980
        %v985 = vunpack.c.l.b16 %v974
        %v986 = vunpack.c.l.b16 %v975
        %v987 = vpack.c.b16 %v986, %v985
        %vm989 = vcmask 130048
        %v991 = vsel %vm989, %v976, 0
        %993 = vmatpush.bf16.msra.mxu0 0
        %994 = vmatpush.bf16.msra.mxu0 0
        %995 = vmatpush.bf16.msra.mxu0 0
        %996 = vmatpush.bf16.msra.mxu0 0
        %997 = vmatpush.bf16.msra.mxu0 0
        %998 = vmatpush.bf16.msra.mxu0 0
        %999 = vmatpush.bf16.msra.mxu0 0
        %1000 = vmatpush.bf16.msra.mxu0 %v987
        %1001 = vmatmul.bf16.gmra.mxu0 %v991
        %v1002 = vpop.f32.mrf.mxu0
        %v1003 = vadd.f32 %v981, %v1002
        %v1004 = vpop.f32.mrf.mxu0
        %1005 = vdwg.mxu0
        %v1006 = vmul.f32 %v1003, 0.5
        %v1007 = vmul.f32 %v1003, 0.70710677
        %v1008 = vmul.f32 %v1007, %v1007
        %v1009 = vmin.f32 16.0, %v1008
        %v1010 = vmul.f32 %v1009, 2.1237322e-06
        %v1011 = vadd.f32 %v1010, 0.00028619796
        %v1012 = vmul.f32 %v1009, %v1011
        %v1013 = vadd.f32 %v1012, 0.0036580483
        %v1014 = vmul.f32 %v1009, %v1013
        %v1015 = vadd.f32 %v1014, 0.05243302
        %v1016 = vmul.f32 %v1009, %v1015
        %v1017 = vadd.f32 %v1016, 0.18741608
        %v1018 = vmul.f32 %v1009, %v1017
        %v1019 = vadd.f32 %v1018, 1.1283791
        %v1020 = vmul.f32 %v1007, %v1019
        %v1021 = vmul.f32 %v1009, 3.8918573e-05
        %v1022 = vadd.f32 %v1021, 0.001143296
        %v1023 = vmul.f32 %v1009, %v1022
        %v1024 = vadd.f32 %v1023, 0.014752088
        %v1025 = vmul.f32 %v1009, %v1024
        %v1026 = vadd.f32 %v1025, 0.112945676
        %v1027 = vmul.f32 %v1009, %v1026
        %v1028 = vadd.f32 %v1027, 0.4994258
        %v1029 = vmul.f32 %v1009, %v1028
        %v1030 = vadd.f32 %v1029, 1.0
        %v1031 = vrcp.pop %v1030
        %v1032 = vmul.f32 %v1030, %v1031
        %v1033 = vsub.f32 1.0, %v1032
        %v1034 = vmul.f32 %v1031, %v1033
        %v1035 = vadd.f32 %v1031, %v1034
        %vm1036 = vweird.f32 %v1030
        %vm1037 = vweird.f32 %v1031
        %vm1038 = vmor %vm1036, %vm1037
        %v1039 = vsel %vm1038, %v1031, %v1035
        %v1040 = vand.u32 2147483647, %v1030
        %vm1041 = vcmp.eq.f32.partialorder %v1040, 8.507059e+37
        %v1042 = vand.u32 %v1030, 2147483648
        %v1043 = vor.u32 1.1754944e-38, %v1042
        %v1044 = vsel %vm1041, %v1043, %v1039
        %v1045 = vmul.f32 %v1020, %v1044
        %v1046 = vmin.f32 %v1045, 1.0
        %v1047 = vmax.f32 %v1046, -1.0
        %v1048 = vadd.f32 %v1047, 1.0
        %v1049 = vmul.f32 %v1006, %v1048
        %v1050 = vpack.c.bf16 %v1049, %v1049
        %v1051 = vld [vmem:[#allocation6] sm:$0x1]
        %v1052 = vld [vmem:[%s4] sm:$0x3]
        %1054 = vset.pattern.permute.xlu0 0
        %1055 = vperm.xlu0 %1054, %v1052
        %v1056 = vpop.permute.xlu0 %1055
        %vm1058 = vcmask 15360
        %v1060 = vsel %vm1058, %v1051, 0
        %vm1062 = vcmask 1040384
        %v1064 = vsel %vm1062, %v1050, 0
        %1066 = vmatpush.bf16.msra.mxu0 0
        %1067 = vmatpush.bf16.msra.mxu0 0
        %1068 = vmatpush.bf16.msra.mxu0 0
        %1069 = vmatpush.bf16.msra.mxu0 0
        %1070 = vmatpush.bf16.msra.mxu0 0
        %1071 = vmatpush.bf16.msra.mxu0 0
        %1072 = vmatpush.bf16.msra.mxu0 0
        %1073 = vmatpush.bf16.msra.mxu0 %v1064
        %1074 = vmatmul.bf16.gmra.mxu0 %v1060
        %v1075 = vpop.f32.mrf.mxu0
        %v1076 = vadd.f32 %v1056, %v1075
        %v1077 = vpop.f32.mrf.mxu0
        %1078 = vdwg.mxu0
        %vm1079 = vcmask 254976
        %v1080 = vsel %vm1079, %v1076, 0.0
        %v1081 = vrot.slane %v1080, 4
        %v1082 = vadd.f32 %v1080, %v1081
        %v1083 = vrot.slane %v1082, 2
        %v1084 = vadd.f32 %v1082, %v1083
        %v1085 = vrot.slane %v1084, 1
        %v1086 = vadd.f32 %v1084, %v1085
        %v1087 = vrcp.pop 2.0
        %v1088 = vmul.f32 2.0, %v1087
        %v1089 = vsub.f32 1.0, %v1088
        %v1090 = vmul.f32 %v1087, %v1089
        %v1091 = vadd.f32 %v1087, %v1090
        %vm1092 = vweird.f32 %v1087
        %v1093 = vsel %vm1092, %v1087, %v1091
        %v1094 = vmul.f32 %v1086, %v1093
        %v1095 = vsub.f32 %v1076, %v1094
        %v1096 = vmul.f32 %v1095, %v1095
        %v1097 = vsel %vm1079, %v1096, 0.0
        %v1098 = vrot.slane %v1097, 4
        %v1099 = vadd.f32 %v1097, %v1098
        %v1100 = vrot.slane %v1099, 2
        %v1101 = vadd.f32 %v1099, %v1100
        %v1102 = vrot.slane %v1101, 1
        %v1103 = vadd.f32 %v1101, %v1102
        %v1104 = vmul.f32 %v1103, %v1093
        %v1105 = vadd.f32 %v1104, 1e-06
        %v1106 = vrsqrt.pop %v1105
        %v1107 = vmul.f32 %v1106, %v1105
        %v1108 = vmul.f32 %v1107, %v1106
        %v1109 = vmul.f32 0.5, %v1108
        %v1110 = vsub.f32 1.5, %v1109
        %v1111 = vmul.f32 %v1106, %v1110
        %vm1112 = vweird.f32 %v1105
        %vm1113 = vweird.f32 %v1106
        %vm1114 = vmor %vm1112, %vm1113
        %v1115 = vsel %vm1114, %v1106, %v1111
        %v1116 = vmul.f32 %v1095, %v1115
        %v1117 = vld [vmem:[%s5] sm:$0x3]
        %1119 = vset.pattern.permute.xlu0 0
        %1120 = vperm.xlu0 %1119, %v1117
        %v1121 = vpop.permute.xlu0 %1120
        %v1123 = vmul.f32 %v1116, %v1121
        %v1124 = vld [vmem:[%s6] sm:$0x3]
        %1126 = vset.pattern.permute.xlu0 0
        %1127 = vperm.xlu0 %1126, %v1124
        %v1128 = vpop.permute.xlu0 %1127
        %v1130 = vadd.f32 %v1123, %v1128
        %v1131 = vpack.c.bf16 %v1130, %v1130
        %v1132 = vld [vmem:[%s7] sm:$0xf]
        %v1133 = vld [vmem:[%s7 + $0x4] sm:$0xf]
        %v1134 = vld [vmem:[%s7 + $0x8] sm:$0xf]
        %v1135 = vld [vmem:[%s7 + $0xc] sm:$0xf]
        %v1136 = vld [vmem:[%s7 + $0x10] sm:$0xf]
        %v1137 = vld [vmem:[%s7 + $0x14] sm:$0xf]
        %v1138 = vld [vmem:[%s7 + $0x18] sm:$0xf]
        %v1139 = vld [vmem:[%s7 + $0x1c] sm:$0xf]
        %v1140 = vld [vmem:[#allocation8] sm:$0x1]
        %v1142 = vperm.slane %v1140, 0
        %v1152 = vunpack.c.l.b16 %v1132
        %v1153 = vunpack.c.l.b16 %v1133
        %v1154 = vunpack.c.l.b16 %v1134
        %v1155 = vunpack.c.l.b16 %v1135
        %v1156 = vunpack.c.l.b16 %v1136
        %v1157 = vunpack.c.l.b16 %v1137
        %v1158 = vunpack.c.l.b16 %v1138
        %v1159 = vunpack.c.l.b16 %v1139
        %v1160 = vpack.c.b16 %v1153, %v1152
        %v1161 = vpack.c.b16 %v1155, %v1154
        %v1162 = vpack.c.b16 %v1157, %v1156
        %v1163 = vpack.c.b16 %v1159, %v1158
        %vm1164 = vcmask 261120
        %v1166 = vsel %vm1164, %v987, 0
        %v1169 = vsel %vm1164, %v1160, 0
        %v1172 = vsel %vm1164, %v1161, 0
        %v1175 = vsel %vm1164, %v1162, 0
        %v1178 = vsel %vm1164, %v1163, 0
        %1180 = vmatpush.bf16.xpose.msra.mxu0 0
        %1181 = vmatpush.bf16.xpose.msra.mxu0 0
        %1182 = vmatpush.bf16.xpose.msra.mxu0 0
        %1183 = vmatpush.bf16.xpose.msra.mxu0 0
        %1184 = vmatpush.bf16.xpose.msra.mxu0 %v1178
        %1185 = vmatpush.bf16.xpose.msra.mxu0 %v1175
        %1186 = vmatpush.bf16.xpose.msra.mxu0 %v1172
        %1187 = vmatpush.bf16.xpose.msra.mxu0 %v1169
        %1188 = vmatmul.bf16.gmra.mxu0 %v1166
        %v1189 = vpop.f32.mrf.mxu0
        %v1190 = vadd.f32 %v1142, %v1189
        %v1191 = vpop.f32.mrf.mxu0
        %v1192 = vadd.f32 %v1142, %v1191
        %1193 = vdwg.mxu0
        %v1194 = vmul.f32 %v1190, 0.5
        %v1195 = vmul.f32 %v1192, 0.5
        %v1196 = vmul.f32 %v1190, 0.70710677
        %v1197 = vmul.f32 %v1192, 0.70710677
        %v1198 = vmul.f32 %v1196, %v1196
        %v1199 = vmin.f32 16.0, %v1198
        %v1200 = vmul.f32 %v1199, 2.1237322e-06
        %v1201 = vadd.f32 %v1200, 0.00028619796
        %v1202 = vmul.f32 %v1199, %v1201
        %v1203 = vadd.f32 %v1202, 0.0036580483
        %v1204 = vmul.f32 %v1199, %v1203
        %v1205 = vadd.f32 %v1204, 0.05243302
        %v1206 = vmul.f32 %v1199, %v1205
        %v1207 = vadd.f32 %v1206, 0.18741608
        %v1208 = vmul.f32 %v1199, %v1207
        %v1209 = vadd.f32 %v1208, 1.1283791
        %v1210 = vmul.f32 %v1196, %v1209
        %v1211 = vmul.f32 %v1199, 3.8918573e-05
        %v1212 = vadd.f32 %v1211, 0.001143296
        %v1213 = vmul.f32 %v1199, %v1212
        %v1214 = vadd.f32 %v1213, 0.014752088
        %v1215 = vmul.f32 %v1199, %v1214
        %v1216 = vadd.f32 %v1215, 0.112945676
        %v1217 = vmul.f32 %v1199, %v1216
        %v1218 = vadd.f32 %v1217, 0.4994258
        %v1219 = vmul.f32 %v1199, %v1218
        %v1220 = vadd.f32 %v1219, 1.0
        %v1221 = vrcp.pop %v1220
        %v1222 = vmul.f32 %v1220, %v1221
        %v1223 = vsub.f32 1.0, %v1222
        %v1224 = vmul.f32 %v1221, %v1223
        %v1225 = vadd.f32 %v1221, %v1224
        %vm1226 = vweird.f32 %v1220
        %vm1227 = vweird.f32 %v1221
        %vm1228 = vmor %vm1226, %vm1227
        %v1229 = vsel %vm1228, %v1221, %v1225
        %v1230 = vand.u32 2147483647, %v1220
        %vm1231 = vcmp.eq.f32.partialorder %v1230, 8.507059e+37
        %v1232 = vand.u32 %v1220, 2147483648
        %v1233 = vor.u32 1.1754944e-38, %v1232
        %v1234 = vsel %vm1231, %v1233, %v1229
        %v1235 = vmul.f32 %v1210, %v1234
        %v1236 = vmin.f32 %v1235, 1.0
        %v1237 = vmax.f32 %v1236, -1.0
        %v1238 = vmul.f32 %v1197, %v1197
        %v1239 = vmin.f32 16.0, %v1238
        %v1240 = vmul.f32 %v1239, 2.1237322e-06
        %v1241 = vadd.f32 %v1240, 0.00028619796
        %v1242 = vmul.f32 %v1239, %v1241
        %v1243 = vadd.f32 %v1242, 0.0036580483
        %v1244 = vmul.f32 %v1239, %v1243
        %v1245 = vadd.f32 %v1244, 0.05243302
        %v1246 = vmul.f32 %v1239, %v1245
        %v1247 = vadd.f32 %v1246, 0.18741608
        %v1248 = vmul.f32 %v1239, %v1247
        %v1249 = vadd.f32 %v1248, 1.1283791
        %v1250 = vmul.f32 %v1197, %v1249
        %v1251 = vmul.f32 %v1239, 3.8918573e-05
        %v1252 = vadd.f32 %v1251, 0.001143296
        %v1253 = vmul.f32 %v1239, %v1252
        %v1254 = vadd.f32 %v1253, 0.014752088
        %v1255 = vmul.f32 %v1239, %v1254
        %v1256 = vadd.f32 %v1255, 0.112945676
        %v1257 = vmul.f32 %v1239, %v1256
        %v1258 = vadd.f32 %v1257, 0.4994258
        %v1259 = vmul.f32 %v1239, %v1258
        %v1260 = vadd.f32 %v1259, 1.0
        %v1261 = vrcp.pop %v1260
        %v1262 = vmul.f32 %v1260, %v1261
        %v1263 = vsub.f32 1.0, %v1262
        %v1264 = vmul.f32 %v1261, %v1263
        %v1265 = vadd.f32 %v1261, %v1264
        %vm1266 = vweird.f32 %v1260
        %vm1267 = vweird.f32 %v1261
        %vm1268 = vmor %vm1266, %vm1267
        %v1269 = vsel %vm1268, %v1261, %v1265
        %v1270 = vand.u32 2147483647, %v1260
        %vm1271 = vcmp.eq.f32.partialorder %v1270, 8.507059e+37
        %v1272 = vand.u32 %v1260, 2147483648
        %v1273 = vor.u32 1.1754944e-38, %v1272
        %v1274 = vsel %vm1271, %v1273, %v1269
        %v1275 = vmul.f32 %v1250, %v1274
        %v1276 = vmin.f32 %v1275, 1.0
        %v1277 = vmax.f32 %v1276, -1.0
        %v1278 = vadd.f32 %v1237, 1.0
        %v1279 = vadd.f32 %v1277, 1.0
        %v1280 = vmul.f32 %v1194, %v1278
        %v1281 = vmul.f32 %v1195, %v1279
        %v1282 = vpack.c.bf16 %v1280, %v1280
        %v1283 = vpack.c.bf16 %v1281, %v1281
        %v1284 = vld [vmem:[%s9] sm:$0xf]
        %v1285 = vld [vmem:[%s9 + $0x4] sm:$0xf]
        %v1286 = vld [vmem:[%s9 + $0x8] sm:$0xf]
        %v1287 = vld [vmem:[%s9 + $0xc] sm:$0xf]
        %v1288 = vld [vmem:[#allocation9] sm:$0x1]
        %v1290 = vperm.slane %v1288, 0
        %v1294 = vunpack.c.l.b16 %v1282
        %v1295 = vunpack.c.l.b16 %v1283
        %v1296 = vpack.c.b16 %v1295, %v1294
        %v1301 = vunpack.c.l.b16 %v1284
        %v1302 = vunpack.c.l.b16 %v1285
        %v1303 = vunpack.c.l.b16 %v1286
        %v1304 = vunpack.c.l.b16 %v1287
        %v1305 = vpack.c.b16 %v1302, %v1301
        %v1306 = vpack.c.b16 %v1304, %v1303
        %v1308 = vsel %vm1164, %v1296, 0
        %v1311 = vsel %vm1164, %v1305, 0
        %v1314 = vsel %vm1164, %v1306, 0
        %1316 = vmatpush.bf16.xpose.msra.mxu0 0
        %1317 = vmatpush.bf16.xpose.msra.mxu0 0
        %1318 = vmatpush.bf16.xpose.msra.mxu0 0
        %1319 = vmatpush.bf16.xpose.msra.mxu0 0
        %1320 = vmatpush.bf16.xpose.msra.mxu0 0
        %1321 = vmatpush.bf16.xpose.msra.mxu0 0
        %1322 = vmatpush.bf16.xpose.msra.mxu0 %v1314
        %1323 = vmatpush.bf16.xpose.msra.mxu0 %v1311
        %1324 = vmatmul.bf16.gmra.mxu0 %v1308
        %v1325 = vpop.f32.mrf.mxu0
        %v1326 = vadd.f32 %v1290, %v1325
        %v1327 = vpop.f32.mrf.mxu0
        %v1328 = vadd.f32 %v1290, %v1327
        %1329 = vdwg.mxu0
        %v1330 = vld [vmem:[#allocation11] sm:$0x1]
        %v1331 = vld [vmem:[#allocation12] sm:$0x1]
        %v1332 = vsel %vm1164, %v1326, 0.0
        %1333 = vadd.xlane.f32.xlu0 %v1332
        %v1334 = vpop.xlane.xlu0 %1333
        %v1335 = vsel %vm1164, %v1328, 0.0
        %1336 = vadd.xlane.f32.xlu0 %v1335
        %v1337 = vpop.xlane.xlu0 %1336
        %v1338 = vrcp.pop 32.0
        %v1339 = vmul.f32 32.0, %v1338
        %v1340 = vsub.f32 1.0, %v1339
        %v1341 = vmul.f32 %v1338, %v1340
        %v1342 = vadd.f32 %v1338, %v1341
        %vm1343 = vweird.f32 %v1338
        %v1344 = vsel %vm1343, %v1338, %v1342
        %v1345 = vmul.f32 %v1334, %v1344
        %v1346 = vmul.f32 %v1337, %v1344
        %v1347 = vsub.f32 %v1326, %v1345
        %v1348 = vsub.f32 %v1328, %v1346
        %v1349 = vmul.f32 %v1347, %v1347
        %v1350 = vmul.f32 %v1348, %v1348
        %v1351 = vsel %vm1164, %v1349, 0.0
        %1352 = vadd.xlane.f32.xlu0 %v1351
        %v1353 = vpop.xlane.xlu0 %1352
        %v1354 = vsel %vm1164, %v1350, 0.0
        %1355 = vadd.xlane.f32.xlu0 %v1354
        %v1356 = vpop.xlane.xlu0 %1355
        %v1357 = vmul.f32 %v1353, %v1344
        %v1358 = vmul.f32 %v1356, %v1344
        %v1359 = vadd.f32 %v1357, 1e-06
        %v1360 = vadd.f32 %v1358, 1e-06
        %v1361 = vrsqrt.pop %v1359
        %v1362 = vmul.f32 %v1361, %v1359
        %v1363 = vmul.f32 %v1362, %v1361
        %v1364 = vmul.f32 0.5, %v1363
        %v1365 = vsub.f32 1.5, %v1364
        %v1366 = vmul.f32 %v1361, %v1365
        %vm1367 = vweird.f32 %v1359
        %vm1368 = vweird.f32 %v1361
        %vm1369 = vmor %vm1367, %vm1368
        %v1370 = vsel %vm1369, %v1361, %v1366
        %v1371 = vrsqrt.pop %v1360
        %v1372 = vmul.f32 %v1371, %v1360
        %v1373 = vmul.f32 %v1372, %v1371
        %v1374 = vmul.f32 0.5, %v1373
        %v1375 = vsub.f32 1.5, %v1374
        %v1376 = vmul.f32 %v1371, %v1375
        %vm1377 = vweird.f32 %v1360
        %vm1378 = vweird.f32 %v1371
        %vm1379 = vmor %vm1377, %vm1378
        %v1380 = vsel %vm1379, %v1371, %v1376
        %v1381 = vmul.f32 %v1347, %v1370
        %v1382 = vmul.f32 %v1348, %v1380
        %v1384 = vperm.slane %v1330, 0
        %v1386 = vmul.f32 %v1381, %v1384
        %v1387 = vmul.f32 %v1382, %v1384
        %v1389 = vperm.slane %v1331, 0
        %v1391 = vadd.f32 %v1386, %v1389
        %v1392 = vadd.f32 %v1387, %v1389
        %v1393 = vpack.c.bf16 %v1392, %v1391
        %v1394 = vld [vmem:[%s13] sm:$0xf]
        %v1395 = vld [vmem:[%s13 + $0x4] sm:$0xf]
        %v1396 = vld [vmem:[%s13 + $0x8] sm:$0xf]
        %v1397 = vld [vmem:[%s13 + $0xc] sm:$0xf]
        %v1398 = vld [vmem:[#allocation14] sm:$0x1]
        %v1400 = vperm.slane %v1398, 0
        %1402 = vrot.lane.b32.xlu0 %v1296, 96
        %v1403 = vpop.permute.xlu0 %1402
        %v1408 = vunpack.c.l.b16 %v1394
        %v1409 = vunpack.c.l.b16 %v1395
        %v1410 = vunpack.c.l.b16 %v1396
        %v1411 = vunpack.c.l.b16 %v1397
        %v1412 = vpack.c.b16 %v1409, %v1408
        %v1413 = vpack.c.b16 %v1411, %v1410
        %v1415 = vsel %vm1164, %v1403, 0
        %v1418 = vsel %vm1164, %v1412, 0
        %v1421 = vsel %vm1164, %v1413, 0
        %1423 = vmatpush.bf16.xpose.msra.mxu0 0
        %1424 = vmatpush.bf16.xpose.msra.mxu0 0
        %1425 = vmatpush.bf16.xpose.msra.mxu0 0
        %1426 = vmatpush.bf16.xpose.msra.mxu0 0
        %1427 = vmatpush.bf16.xpose.msra.mxu0 0
        %1428 = vmatpush.bf16.xpose.msra.mxu0 0
        %1429 = vmatpush.bf16.xpose.msra.mxu0 %v1421
        %1430 = vmatpush.bf16.xpose.msra.mxu0 %v1418
        %1431 = vmatmul.bf16.gmra.mxu0 %v1415
        %v1432 = vpop.f32.mrf.mxu0
        %v1433 = vadd.f32 %v1400, %v1432
        %v1434 = vpop.f32.mrf.mxu0
        %v1435 = vadd.f32 %v1400, %v1434
        %1436 = vdwg.mxu0
        %v1437 = vld [vmem:[#allocation15] sm:$0x1]
        %v1438 = vld [vmem:[#allocation17] sm:$0x1]
        %v1439 = vsel %vm1164, %v1433, 0.0
        %1440 = vadd.xlane.f32.xlu0 %v1439
        %v1441 = vpop.xlane.xlu0 %1440
        %v1442 = vsel %vm1164, %v1435, 0.0
        %1443 = vadd.xlane.f32.xlu0 %v1442
        %v1444 = vpop.xlane.xlu0 %1443
        %v1445 = vmul.f32 %v1441, %v1344
        %v1446 = vmul.f32 %v1444, %v1344
        %v1447 = vsub.f32 %v1433, %v1445
        %v1448 = vsub.f32 %v1435, %v1446
        %v1449 = vmul.f32 %v1447, %v1447
        %v1450 = vmul.f32 %v1448, %v1448
        %v1451 = vsel %vm1164, %v1449, 0.0
        %1452 = vadd.xlane.f32.xlu0 %v1451
        %v1453 = vpop.xlane.xlu0 %1452
        %v1454 = vsel %vm1164, %v1450, 0.0
        %1455 = vadd.xlane.f32.xlu0 %v1454
        %v1456 = vpop.xlane.xlu0 %1455
        %v1457 = vmul.f32 %v1453, %v1344
        %v1458 = vmul.f32 %v1456, %v1344
        %v1459 = vadd.f32 %v1457, 1e-06
        %v1460 = vadd.f32 %v1458, 1e-06
        %v1461 = vrsqrt.pop %v1459
        %v1462 = vmul.f32 %v1461, %v1459
        %v1463 = vmul.f32 %v1462, %v1461
        %v1464 = vmul.f32 0.5, %v1463
        %v1465 = vsub.f32 1.5, %v1464
        %v1466 = vmul.f32 %v1461, %v1465
        %vm1467 = vweird.f32 %v1459
        %vm1468 = vweird.f32 %v1461
        %vm1469 = vmor %vm1467, %vm1468
        %v1470 = vsel %vm1469, %v1461, %v1466
        %v1471 = vrsqrt.pop %v1460
        %v1472 = vmul.f32 %v1471, %v1460
        %v1473 = vmul.f32 %v1472, %v1471
        %v1474 = vmul.f32 0.5, %v1473
        %v1475 = vsub.f32 1.5, %v1474
        %v1476 = vmul.f32 %v1471, %v1475
        %vm1477 = vweird.f32 %v1460
        %vm1478 = vweird.f32 %v1471
        %vm1479 = vmor %vm1477, %vm1478
        %v1480 = vsel %vm1479, %v1471, %v1476
        %v1481 = vmul.f32 %v1447, %v1470
        %v1482 = vmul.f32 %v1448, %v1480
        %v1484 = vperm.slane %v1437, 0
        %v1486 = vmul.f32 %v1481, %v1484
        %v1487 = vmul.f32 %v1482, %v1484
        %v1489 = vperm.slane %v1438, 0
        %v1491 = vadd.f32 %v1486, %v1489
        %v1492 = vadd.f32 %v1487, %v1489
        %v1493 = vpack.c.bf16 %v1492, %v1491
        %v1494 = vld [vmem:[#allocation18] sm:$0xf]
        %v1495 = vld [vmem:[#allocation18 + $0x4] sm:$0xf]
        %v1496 = vld [vmem:[#allocation18 + $0x8] sm:$0xf]
        %v1497 = vld [vmem:[#allocation18 + $0xc] sm:$0xf]
        %v1498 = vld [vmem:[#allocation20] sm:$0x1]
        %v1500 = vperm.slane %v1498, 0
        %v1506 = vunpack.c.l.b16 %v1494
        %v1507 = vunpack.c.l.b16 %v1495
        %v1508 = vunpack.c.l.b16 %v1496
        %v1509 = vunpack.c.l.b16 %v1497
        %v1510 = vpack.c.b16 %v1507, %v1506
        %v1511 = vpack.c.b16 %v1509, %v1508
        %v1513 = vsel %vm1164, %v1131, 0
        %v1516 = vsel %vm1164, %v1510, 0
        %v1519 = vsel %vm1164, %v1511, 0
        %1521 = vmatpush.bf16.xpose.msra.mxu0 0
        %1522 = vmatpush.bf16.xpose.msra.mxu0 0
        %1523 = vmatpush.bf16.xpose.msra.mxu0 0
        %1524 = vmatpush.bf16.xpose.msra.mxu0 0
        %1525 = vmatpush.bf16.xpose.msra.mxu0 0
        %1526 = vmatpush.bf16.xpose.msra.mxu0 0
        %1527 = vmatpush.bf16.xpose.msra.mxu0 %v1519
        %1528 = vmatpush.bf16.xpose.msra.mxu0 %v1516
        %1529 = vmatmul.bf16.gmra.mxu0 %v1513
        %v1530 = vpop.f32.mrf.mxu0
        %v1531 = vadd.f32 %v1500, %v1530
        %v1532 = vpop.f32.mrf.mxu0
        %1533 = vdwg.mxu0
        %v1534 = vpack.c.bf16 %v1531, %v1531
        %v1535 = vld [vmem:[#allocation21] sm:$0xf]
        %v1536 = vld [vmem:[#allocation21 + $0x4] sm:$0xf]
        %v1537 = vld [vmem:[#allocation21 + $0x8] sm:$0xf]
        %v1538 = vld [vmem:[#allocation21 + $0xc] sm:$0xf]
        %v1539 = vld [vmem:[#allocation23] sm:$0x1]
        %v1541 = vperm.slane %v1539, 0
        %v1547 = vunpack.c.l.b16 %v1535
        %v1548 = vunpack.c.l.b16 %v1536
        %v1549 = vunpack.c.l.b16 %v1537
        %v1550 = vunpack.c.l.b16 %v1538
        %v1551 = vpack.c.b16 %v1548, %v1547
        %v1552 = vpack.c.b16 %v1550, %v1549
        %v1554 = vsel %vm1164, %v1393, 0
        %v1557 = vsel %vm1164, %v1551, 0
        %v1560 = vsel %vm1164, %v1552, 0
        %1562 = vmatpush.bf16.xpose.msra.mxu0 0
        %1563 = vmatpush.bf16.xpose.msra.mxu0 0
        %1564 = vmatpush.bf16.xpose.msra.mxu0 0
        %1565 = vmatpush.bf16.xpose.msra.mxu0 0
        %1566 = vmatpush.bf16.xpose.msra.mxu0 0
        %1567 = vmatpush.bf16.xpose.msra.mxu0 0
        %1568 = vmatpush.bf16.xpose.msra.mxu0 %v1560
        %1569 = vmatpush.bf16.xpose.msra.mxu0 %v1557
        %1570 = vmatmul.bf16.gmra.mxu0 %v1554
        %v1571 = vpop.f32.mrf.mxu0
        %v1572 = vadd.f32 %v1541, %v1571
        %v1573 = vpop.f32.mrf.mxu0
        %v1574 = vadd.f32 %v1541, %v1573
        %1575 = vdwg.mxu0
        %v1576 = vpack.c.bf16 %v1572, %v1572
        %v1577 = vpack.c.bf16 %v1574, %v1574
        %v1578 = vld [vmem:[%s21] sm:$0xf]
        %v1579 = vld [vmem:[%s21 + $0x4] sm:$0xf]
        %v1580 = vld [vmem:[%s21 + $0x8] sm:$0xf]
        %v1581 = vld [vmem:[%s21 + $0xc] sm:$0xf]
        %v1582 = vld [vmem:[%s22] sm:$0x1]
        %v1584 = vperm.slane %v1582, 0
        %v1590 = vunpack.c.l.b16 %v1578
        %v1591 = vunpack.c.l.b16 %v1579
        %v1592 = vunpack.c.l.b16 %v1580
        %v1593 = vunpack.c.l.b16 %v1581
        %v1594 = vpack.c.b16 %v1591, %v1590
        %v1595 = vpack.c.b16 %v1593, %v1592
        %v1597 = vsel %vm1164, %v1493, 0
        %v1600 = vsel %vm1164, %v1594, 0
        %v1603 = vsel %vm1164, %v1595, 0
        %1605 = vmatpush.bf16.xpose.msra.mxu0 0
        %1606 = vmatpush.bf16.xpose.msra.mxu0 0
        %1607 = vmatpush.bf16.xpose.msra.mxu0 0
        %1608 = vmatpush.bf16.xpose.msra.mxu0 0
        %1609 = vmatpush.bf16.xpose.msra.mxu0 0
        %1610 = vmatpush.bf16.xpose.msra.mxu0 0
        %1611 = vmatpush.bf16.xpose.msra.mxu0 %v1603
        %1612 = vmatpush.bf16.xpose.msra.mxu0 %v1600
        %1613 = vmatmul.bf16.gmra.mxu0 %v1597
        %v1614 = vpop.f32.mrf.mxu0
        %v1615 = vadd.f32 %v1584, %v1614
        %v1616 = vpop.f32.mrf.mxu0
        %v1617 = vadd.f32 %v1584, %v1616
        %1618 = vdwg.mxu0
        %v1619 = vpack.c.bf16 %v1615, %v1615
        %v1620 = vpack.c.bf16 %v1617, %v1617
        %v1623 = vunpack.c.l.b16 %v1576
        %v1624 = vunpack.c.l.b16 %v1577
        %v1625 = vpack.c.b16 %v1624, %v1623
        %vm1626 = vcmask 64512
        %v1628 = vsel %vm1626, %v1534, 0
        %v1631 = vsel %vm1626, %v1625, 0
        %1633 = vmatpush.bf16.xpose.msra.mxu0 0
        %1634 = vmatpush.bf16.xpose.msra.mxu0 0
        %1635 = vmatpush.bf16.xpose.msra.mxu0 0
        %1636 = vmatpush.bf16.xpose.msra.mxu0 0
        %1637 = vmatpush.bf16.xpose.msra.mxu0 0
        %1638 = vmatpush.bf16.xpose.msra.mxu0 0
        %1639 = vmatpush.bf16.xpose.msra.mxu0 0
        %1640 = vmatpush.bf16.xpose.msra.mxu0 %v1631
        %1641 = vmatmul.bf16.gmra.mxu0 %v1628
        %v1642 = vpop.f32.mrf.mxu0
        %v1643 = vadd.f32 0.0, %v1642
        %v1644 = vpop.f32.mrf.mxu0
        %1645 = vdwg.mxu0
        %vm1646 = vcmask 123904
        %v1647 = vsel %vm1646, %v1643, -inf
        %1648 = vmax.xlane.f32.xlu0 %v1647
        %v1649 = vpop.xlane.xlu0 %1648
        %v1650 = vsub.f32 %v1643, %v1649
        %v1651 = vmul.f32 %v1650, 1.442695
        %v1652 = vpow.pop %v1651
        %v1653 = vsel %vm1646, %v1652, 0.0
        %1654 = vadd.xlane.f32.xlu0 %v1653
        %v1655 = vpop.xlane.xlu0 %1654
        %v1656 = vrcp.pop %v1655
        %v1657 = vmul.f32 %v1652, %v1656
        %v1658 = vpack.c.bf16 %v1657, %v1657
        %v1661 = vunpack.c.l.b16 %v1619
        %v1662 = vunpack.c.l.b16 %v1620
        %v1663 = vpack.c.b16 %v1662, %v1661
        %v1666 = vsel %vm989, %v1658, 0
        %1668 = vmatpush.bf16.msra.mxu0 0
        %1669 = vmatpush.bf16.msra.mxu0 0
        %1670 = vmatpush.bf16.msra.mxu0 0
        %1671 = vmatpush.bf16.msra.mxu0 0
        %1672 = vmatpush.bf16.msra.mxu0 0
        %1673 = vmatpush.bf16.msra.mxu0 0
        %1674 = vmatpush.bf16.msra.mxu0 0
        %1675 = vmatpush.bf16.msra.mxu0 %v1663
        %1676 = vmatmul.bf16.gmra.mxu0 %v1666
        %v1677 = vpop.f32.mrf.mxu0
        %v1678 = vadd.f32 0.0, %v1677
        %v1679 = vpop.f32.mrf.mxu0
        %1680 = vdwg.mxu0
        %v1681 = vpack.c.bf16 %v1678, %v1678
        %vm1682 = vcmask 57344
        %1683 = vst.msk [vmem:[#allocation2] sm:$0x1] %vm1682, %v1681
        %v1685 = vunpack.c.l.b16 %v1534
        %v1686 = vpack.c.b16 %v1685, %v1685
        %1687 = vrot.lane.b32.xlu0 %v1686, 120
        %v1688 = vpop.permute.xlu0 %1687
        %1689 = vrot.lane.b32.xlu0 %v1625, 120
        %v1690 = vpop.permute.xlu0 %1689
        %v1692 = vsel %vm1626, %v1688, 0
        %v1695 = vsel %vm1626, %v1690, 0
        %1697 = vmatpush.bf16.xpose.msra.mxu0 0
        %1698 = vmatpush.bf16.xpose.msra.mxu0 0
        %1699 = vmatpush.bf16.xpose.msra.mxu0 0
        %1700 = vmatpush.bf16.xpose.msra.mxu0 0
        %1701 = vmatpush.bf16.xpose.msra.mxu0 0
        %1702 = vmatpush.bf16.xpose.msra.mxu0 0
        %1703 = vmatpush.bf16.xpose.msra.mxu0 0
        %1704 = vmatpush.bf16.xpose.msra.mxu0 %v1695
        %1705 = vmatmul.bf16.gmra.mxu0 %v1692
        %v1706 = vpop.f32.mrf.mxu0
        %v1707 = vadd.f32 0.0, %v1706
        %v1708 = vpop.f32.mrf.mxu0
        %1709 = vdwg.mxu0
        %v1710 = vsel %vm1646, %v1707, -inf
        %1711 = vmax.xlane.f32.xlu0 %v1710
        %v1712 = vpop.xlane.xlu0 %1711
        %v1713 = vsub.f32 %v1707, %v1712
        %v1714 = vmul.f32 %v1713, 1.442695
        %v1715 = vpow.pop %v1714
        %v1716 = vsel %vm1646, %v1715, 0.0
        %1717 = vadd.xlane.f32.xlu0 %v1716
        %v1718 = vpop.xlane.xlu0 %1717
        %v1719 = vrcp.pop %v1718
        %v1720 = vmul.f32 %v1715, %v1719
        %v1721 = vpack.c.bf16 %v1720, %v1720
        %1722 = vrot.lane.b32.xlu0 %v1663, 120
        %v1723 = vpop.permute.xlu0 %1722
        %v1726 = vsel %vm989, %v1721, 0
        %1728 = vmatpush.bf16.msra.mxu0 0
        %1729 = vmatpush.bf16.msra.mxu0 0
        %1730 = vmatpush.bf16.msra.mxu0 0
        %1731 = vmatpush.bf16.msra.mxu0 0
        %1732 = vmatpush.bf16.msra.mxu0 0
        %1733 = vmatpush.bf16.msra.mxu0 0
        %1734 = vmatpush.bf16.msra.mxu0 0
        %1735 = vmatpush.bf16.msra.mxu0 %v1723
        %1736 = vmatmul.bf16.gmra.mxu0 %v1726
        %v1737 = vpop.f32.mrf.mxu0
        %v1738 = vadd.f32 0.0, %v1737
        %v1739 = vpop.f32.mrf.mxu0
        %1740 = vdwg.mxu0
        %v1741 = vpack.c.bf16 %v1738, %v1738
        %v1743 = vrot.slane %v1741, 3
        %v1746 = vsel %vm1062, %v1741, %v1743
        %1748 = vrot.lane.b32.xlu0 %v1746, 8
        %v1749 = vpop.permute.xlu0 %1748
        %vm1751 = vcmask 122944
        %1752 = vst.msk [vmem:[#allocation2] sm:$0x1] %vm1751, %v1749
        %1753 = vrot.lane.b32.xlu0 %v1686, 112
        %v1754 = vpop.permute.xlu0 %1753
        %1755 = vrot.lane.b32.xlu0 %v1625, 112
        %v1756 = vpop.permute.xlu0 %1755
        %v1758 = vsel %vm1626, %v1754, 0
        %v1761 = vsel %vm1626, %v1756, 0
        %1763 = vmatpush.bf16.xpose.msra.mxu0 0
        %1764 = vmatpush.bf16.xpose.msra.mxu0 0
        %1765 = vmatpush.bf16.xpose.msra.mxu0 0
        %1766 = vmatpush.bf16.xpose.msra.mxu0 0
        %1767 = vmatpush.bf16.xpose.msra.mxu0 0
        %1768 = vmatpush.bf16.xpose.msra.mxu0 0
        %1769 = vmatpush.bf16.xpose.msra.mxu0 0
        %1770 = vmatpush.bf16.xpose.msra.mxu0 %v1761
        %1771 = vmatmul.bf16.gmra.mxu0 %v1758
        %v1772 = vpop.f32.mrf.mxu0
        %v1773 = vadd.f32 0.0, %v1772
        %v1774 = vpop.f32.mrf.mxu0
        %1775 = vdwg.mxu0
        %v1776 = vsel %vm1646, %v1773, -inf
        %1777 = vmax.xlane.f32.xlu0 %v1776
        %v1778 = vpop.xlane.xlu0 %1777
        %v1779 = vsub.f32 %v1773, %v1778
        %v1780 = vmul.f32 %v1779, 1.442695
        %v1781 = vpow.pop %v1780
        %v1782 = vsel %vm1646, %v1781, 0.0
        %1783 = vadd.xlane.f32.xlu0 %v1782
        %v1784 = vpop.xlane.xlu0 %1783
        %v1785 = vrcp.pop %v1784
        %v1786 = vmul.f32 %v1781, %v1785
        %v1787 = vpack.c.bf16 %v1786, %v1786
        %1788 = vrot.lane.b32.xlu0 %v1663, 112
        %v1789 = vpop.permute.xlu0 %1788
        %v1792 = vsel %vm989, %v1787, 0
        %1794 = vmatpush.bf16.msra.mxu0 0
        %1795 = vmatpush.bf16.msra.mxu0 0
        %1796 = vmatpush.bf16.msra.mxu0 0
        %1797 = vmatpush.bf16.msra.mxu0 0
        %1798 = vmatpush.bf16.msra.mxu0 0
        %1799 = vmatpush.bf16.msra.mxu0 0
        %1800 = vmatpush.bf16.msra.mxu0 0
        %1801 = vmatpush.bf16.msra.mxu0 %v1789
        %1802 = vmatmul.bf16.gmra.mxu0 %v1792
        %v1803 = vpop.f32.mrf.mxu0
        %v1804 = vadd.f32 0.0, %v1803
        %v1805 = vpop.f32.mrf.mxu0
        %1806 = vdwg.mxu0
        %v1807 = vpack.c.bf16 %v1804, %v1804
        %v1809 = vrot.slane %v1807, 3
        %v1812 = vsel %vm1062, %v1807, %v1809
        %1814 = vrot.lane.b32.xlu0 %v1812, 16
        %v1815 = vpop.permute.xlu0 %1814
        %vm1817 = vcmask 188544
        %1818 = vst.msk [vmem:[#allocation2] sm:$0x1] %vm1817, %v1815
        %1819 = vrot.lane.b32.xlu0 %v1686, 104
        %v1820 = vpop.permute.xlu0 %1819
        %1821 = vrot.lane.b32.xlu0 %v1625, 104
        %v1822 = vpop.permute.xlu0 %1821
        %v1824 = vsel %vm1626, %v1820, 0
        %v1827 = vsel %vm1626, %v1822, 0
        %1829 = vmatpush.bf16.xpose.msra.mxu0 0
        %1830 = vmatpush.bf16.xpose.msra.mxu0 0
        %1831 = vmatpush.bf16.xpose.msra.mxu0 0
        %1832 = vmatpush.bf16.xpose.msra.mxu0 0
        %1833 = vmatpush.bf16.xpose.msra.mxu0 0
        %1834 = vmatpush.bf16.xpose.msra.mxu0 0
        %1835 = vmatpush.bf16.xpose.msra.mxu0 0
        %1836 = vmatpush.bf16.xpose.msra.mxu0 %v1827
        %1837 = vmatmul.bf16.gmra.mxu0 %v1824
        %v1838 = vpop.f32.mrf.mxu0
        %v1839 = vadd.f32 0.0, %v1838
        %v1840 = vpop.f32.mrf.mxu0
        %1841 = vdwg.mxu0
        %v1842 = vsel %vm1646, %v1839, -inf
        %1843 = vmax.xlane.f32.xlu0 %v1842
        %v1844 = vpop.xlane.xlu0 %1843
        %v1845 = vsub.f32 %v1839, %v1844
        %v1846 = vmul.f32 %v1845, 1.442695
        %v1847 = vpow.pop %v1846
        %v1848 = vsel %vm1646, %v1847, 0.0
        %1849 = vadd.xlane.f32.xlu0 %v1848
        %v1850 = vpop.xlane.xlu0 %1849
        %v1851 = vrcp.pop %v1850
        %v1852 = vmul.f32 %v1847, %v1851
        %v1853 = vpack.c.bf16 %v1852, %v1852
        %1854 = vrot.lane.b32.xlu0 %v1663, 104
        %v1855 = vpop.permute.xlu0 %1854
        %v1858 = vsel %vm989, %v1853, 0
        %1860 = vmatpush.bf16.msra.mxu0 0
        %1861 = vmatpush.bf16.msra.mxu0 0
        %1862 = vmatpush.bf16.msra.mxu0 0
        %1863 = vmatpush.bf16.msra.mxu0 0
        %1864 = vmatpush.bf16.msra.mxu0 0
        %1865 = vmatpush.bf16.msra.mxu0 0
        %1866 = vmatpush.bf16.msra.mxu0 0
        %1867 = vmatpush.bf16.msra.mxu0 %v1855
        %1868 = vmatmul.bf16.gmra.mxu0 %v1858
        %v1869 = vpop.f32.mrf.mxu0
        %v1870 = vadd.f32 0.0, %v1869
        %v1871 = vpop.f32.mrf.mxu0
        %1872 = vdwg.mxu0
        %v1873 = vpack.c.bf16 %v1870, %v1870
        %v1875 = vrot.slane %v1873, 3
        %v1878 = vsel %vm1062, %v1873, %v1875
        %1880 = vrot.lane.b32.xlu0 %v1878, 24
        %v1881 = vpop.permute.xlu0 %1880
        %vm1883 = vcmask 254144
        %1884 = vst.msk [vmem:[#allocation2] sm:$0x1] %vm1883, %v1881
        %v1885 = vld [vmem:[#allocation2] sm:$0x1]
        %v1886 = vld [vmem:[#allocation24] sm:$0xf]
        %v1887 = vld [vmem:[#allocation24 + $0x4] sm:$0xf]
        %v1888 = vld [vmem:[#allocation24 + $0x8] sm:$0xf]
        %v1889 = vld [vmem:[#allocation24 + $0xc] sm:$0xf]
        %v1890 = vld [vmem:[%s24] sm:$0x1]
        %v1892 = vperm.slane %v1890, 0
        %v1898 = vunpack.c.l.b16 %v1886
        %v1899 = vunpack.c.l.b16 %v1887
        %v1900 = vunpack.c.l.b16 %v1888
        %v1901 = vunpack.c.l.b16 %v1889
        %v1902 = vpack.c.b16 %v1899, %v1898
        %v1903 = vpack.c.b16 %v1901, %v1900
        %v1905 = vsel %vm1164, %v1885, 0
        %v1908 = vsel %vm1164, %v1902, 0
        %v1911 = vsel %vm1164, %v1903, 0
        %1913 = vmatpush.bf16.xpose.msra.mxu0 0
        %1914 = vmatpush.bf16.xpose.msra.mxu0 0
        %1915 = vmatpush.bf16.xpose.msra.mxu0 0
        %1916 = vmatpush.bf16.xpose.msra.mxu0 0
        %1917 = vmatpush.bf16.xpose.msra.mxu0 0
        %1918 = vmatpush.bf16.xpose.msra.mxu0 0
        %1919 = vmatpush.bf16.xpose.msra.mxu0 %v1911
        %1920 = vmatpush.bf16.xpose.msra.mxu0 %v1908
        %1921 = vmatmul.bf16.gmra.mxu0 %v1905
        %v1922 = vpop.f32.mrf.mxu0
        %v1923 = vadd.f32 %v1892, %v1922
        %v1924 = vpop.f32.mrf.mxu0
        %1925 = vdwg.mxu0
        %1926 = vst.msk [vmem:[%s967] sm:$0x3] %vm1079, %v1923
        %s1927 = sand.u32 %s585, 1
        %s1928 = scalar_lea.sflag [#allocation5], %s1927
        %s1929 = sand.u32 %s585, 1
        %s1930 = smul.addr %s1929, 2
        %s1931 = scalar_lea.vmem [#allocation26], %s1930
        // Predicated region
        $region177: #{tpu_custom_call.1} parent=119 // pred_check
          %p1932 = pneg %p595
        $region178: #{tpu_custom_call.1} parent=119 // pred_check_branch
          %1934 = sbr.rel (%p1932) target = $region180
        $region179: #{tpu_custom_call.1} parent=119 // pred_region
          %1936 = vsyncadd %s1928, 0
          %s1937 = smul.addr %s47, 2
          %s1938 = scalar_lea.hbm %s25, %s1937
          %s1940 = sshll.u32 %s1931, 4
          %s1941 = int_to_ptr.vmem [resolvable:$true] %s1940
          %s1942 = sshll.u32 %s1938, 4
          %s1943 = int_to_ptr.hbm [resolvable:$true] %s1942
          %1945 = dma.vmem_to_hbm [thread:$0]  %s1941, 32, %s1943, %s1928
        $region180: #{tpu_custom_call.1} parent=119 // pred_fallthru
          _
      $region120: #{tpu_custom_call.1} parent=5 // pred_fallthru
        _
      %p1946 = scmp.le.s32.totalorder 2, %s42
      // Predicated region
      $region181: #{tpu_custom_call.1} parent=5 // pred_check
        %p1947 = pneg %p1946
      $region182: #{tpu_custom_call.1} parent=5 // pred_check_branch
        %1949 = sbr.rel (%p1947) target = $region184
      $region183: #{tpu_custom_call.1} parent=5 // pred_region
        %s1950 = ssub.s32 %s42, 2
        // Predicated region
        $region185: #{tpu_custom_call.1} parent=183 // pred_check
          %p1951 = pneg %p601
        $region186: #{tpu_custom_call.1} parent=183 // pred_check_branch
          %1953 = sbr.rel (%p1951) target = $region188
        $region187: #{tpu_custom_call.1} parent=183 // pred_region
          %s1954 = sand.u32 %s586, 1
          %s1955 = scalar_lea.sflag [#allocation5], %s1954
          %s1956 = sand.u32 %s586, 1
          %s1957 = smul.addr %s1956, 2
          %s1958 = scalar_lea.vmem [#allocation26], %s1957
          %1960 = dma.done %s1955, 32
        $region188: #{tpu_custom_call.1} parent=183 // pred_fallthru
          _
      $region184: #{tpu_custom_call.1} parent=5 // pred_fallthru
        _
    $region6: #{tpu_custom_call.1} parent=1 // loop_footer
      %s46 = sadd.s32 1, %s42
    $region7: #{tpu_custom_call.1} parent=1 // loop_footer_branch
      %41 = sbr.rel target = $region3
    $region8: #{tpu_custom_call.1} parent=1 // loop_exit
      _
    %1961 = vsyncpa [#allocation4], 1
    %s1962 = scalar_lea.sflag [#allocation4], 1
    %1963 = vsyncpa %s1962, 1
    %1964 = vsyncpa [#allocation7], 1
    %1965 = vsyncpa [#allocation10], 1
    %1966 = vsyncpa [#allocation13], 1
    %1967 = vsyncpa [#allocation16], 1
    %1968 = vsyncpa [#allocation19], 1
    %1969 = vsyncpa [#allocation22], 1
    %1970 = vsyncpa [#allocation25], 1
    %1971 = vsyncpa [#allocation5], 1
    %s1972 = scalar_lea.sflag [#allocation5], 1
    %1973 = vsyncpa %s1972, 1

</llo_original>
